<compile_context>
chip_gen: v5e
topology: v5e:2x2
jax: 0.10.0
libtpu: 0.0.40
codegen_flags: <defaults>
</compile_context>

<pallas_src>
import jax
import jax.numpy as jnp
from jax.experimental import pallas as pl
from jax.experimental.pallas import tpu as pltpu

# ---- small, forward-consistent shapes --------------------------------------
B = 2              # batch
S = 8              # sequence length (context_size)
BS = B * S         # flattened token axis
D = 32             # hidden_size
H = 2              # attention heads
DH = D // H        # head dim
FFN = 4 * D        # ffn inner dim
V = 64             # vocab_size
VP = 128           # lane-padded vocab for the logits store
NUM_LAYERS = 2
EPS = 1e-5
NEG_INF = -1e30


def _layernorm(x, gamma, beta):
    mu = jnp.mean(x, axis=-1, keepdims=True)
    var = jnp.mean((x - mu) ** 2, axis=-1, keepdims=True)
    return (x - mu) * jax.lax.rsqrt(var + EPS) * gamma + beta


# -----------------------------------------------------------------------------
# Single fused kernel: embedding gather -> 2 unrolled transformer blocks ->
# LM head.  Everything is resident in VMEM; runs in one grid step.
# -----------------------------------------------------------------------------
def fused_llm_kernel(tok_ref,                                   # SMEM (BS,)
                     emb_ref, mask_ref,
                     g1_ref, b1_ref, wqkv_ref, bqkv_ref, wo_ref, bo_ref,
                     g2_ref, b2_ref, w1_ref, bf1_ref, w2_ref, bf2_ref,
                     hw_ref, hb_ref,
                     logits_ref, xg_ref):
    # ---- fused token-embedding gather (tokens live in SMEM) ----
    for i in range(BS):                                         # static unroll
        xg_ref[pl.ds(i, 1), :] = emb_ref[pl.ds(tok_ref[i], 1), :]
    x = xg_ref[...]                                             # (BS, D) f32

    mask = mask_ref[...]                                        # (BS, BS) additive

    for l in range(NUM_LAYERS):                                 # static unroll
        # ---- attention sub-layer (pre-LN, causal MHA) ----
        h = _layernorm(x, g1_ref[l], b1_ref[l])
        qkv = jnp.dot(h.astype(jnp.bfloat16), wqkv_ref[l],
                      preferred_element_type=jnp.float32) + bqkv_ref[l]  # (BS, 3D)

        wo = wo_ref[l]                                          # (D, D) bf16
        attn = jnp.zeros((BS, D), jnp.float32)
        for hh in range(H):                                     # static unroll
            q = qkv[:, hh * DH:(hh + 1) * DH].astype(jnp.bfloat16)
            k = qkv[:, D + hh * DH:D + (hh + 1) * DH].astype(jnp.bfloat16)
            v = qkv[:, 2 * D + hh * DH:2 * D + (hh + 1) * DH].astype(jnp.bfloat16)
            # scores = q_h @ k_h^T (no explicit transpose); 1/sqrt(DH) already
            # folded into Wq/bq at init.
            s = jax.lax.dot_general(q, k, (((1,), (1,)), ((), ())),
                                    preferred_element_type=jnp.float32)  # (BS,BS)
            s = s + mask                                        # additive mask
            m = jnp.max(s, axis=-1, keepdims=True)
            e = jnp.exp(s - m)
            p = e * pl.reciprocal(jnp.sum(e, axis=-1, keepdims=True), approx=True)
            ctx = jnp.dot(p.astype(jnp.bfloat16), v,
                          preferred_element_type=jnp.float32)   # (BS, DH)
            # accumulate directly through matching rows of Wo (no concat)
            attn = attn + jnp.dot(ctx.astype(jnp.bfloat16),
                                  wo[hh * DH:(hh + 1) * DH, :],
                                  preferred_element_type=jnp.float32)
        x = x + attn + bo_ref[l]

        # ---- FFN sub-layer (pre-LN, GELU) ----
        h2 = _layernorm(x, g2_ref[l], b2_ref[l])
        f = jnp.dot(h2.astype(jnp.bfloat16), w1_ref[l],
                    preferred_element_type=jnp.float32) + bf1_ref[l]
        f = jax.nn.gelu(f, approximate=True)
        f = jnp.dot(f.astype(jnp.bfloat16), w2_ref[l],
                    preferred_element_type=jnp.float32) + bf2_ref[l]
        x = x + f

    # ---- LM head (lane-dense, VP=128-wide unmasked store) ----
    logits_ref[...] = (jnp.dot(x.astype(jnp.bfloat16), hw_ref[...],
                               preferred_element_type=jnp.float32)
                       + hb_ref[...])


# -----------------------------------------------------------------------------
# Deterministic parameter initialization (synthetic; no checkpoint load).
# Matmul weights stored in bf16; embedding / biases / LN params in f32.
# -----------------------------------------------------------------------------
def init_params(key):
    scale = 1.0 / (DH ** 0.5)
    keys = iter(jax.random.split(key, 1 + NUM_LAYERS * 6 + 1))

    def w(shape):
        return jax.random.normal(next(keys), shape, jnp.float32) * 0.02

    emb = w((V, D))                                             # f32 (V, D)

    g1s, b1s, wqkvs, bqkvs, wos, bos = [], [], [], [], [], []
    g2s, b2s, w1s, bf1s, w2s, bf2s = [], [], [], [], [], []
    for _ in range(NUM_LAYERS):
        wq, wk, wv, wo = w((D, D)), w((D, D)), w((D, D)), w((D, D))
        w1, w2 = w((D, FFN)), w((FFN, D))
        bq = bk = bv = jnp.zeros((D,), jnp.float32)
        # fused QKV with the attention scale folded into the Q projection
        wqkv = jnp.concatenate([wq * scale, wk, wv], axis=1)        # (D, 3D)
        bqkv = jnp.concatenate([bq * scale, bk, bv])[None, :]       # (1, 3D)

        g1s.append(jnp.ones((1, D), jnp.float32))
        b1s.append(jnp.zeros((1, D), jnp.float32))
        wqkvs.append(wqkv)
        bqkvs.append(bqkv)
        wos.append(wo)
        bos.append(jnp.zeros((1, D), jnp.float32))
        g2s.append(jnp.ones((1, D), jnp.float32))
        b2s.append(jnp.zeros((1, D), jnp.float32))
        w1s.append(w1)
        bf1s.append(jnp.zeros((1, FFN), jnp.float32))
        w2s.append(w2)
        bf2s.append(jnp.zeros((1, D), jnp.float32))

    def stack(lst, dtype=None):
        a = jnp.stack(lst)
        return a.astype(dtype) if dtype is not None else a

    stacked = (
        stack(g1s), stack(b1s),
        stack(wqkvs, jnp.bfloat16), stack(bqkvs),
        stack(wos, jnp.bfloat16), stack(bos),
        stack(g2s), stack(b2s),
        stack(w1s, jnp.bfloat16), stack(bf1s),
        stack(w2s, jnp.bfloat16), stack(bf2s),
    )

    head_w = jnp.zeros((D, VP), jnp.float32).at[:, :V].set(w((D, V)))
    head_w = head_w.astype(jnp.bfloat16)                          # (D, VP)
    head_b = jnp.zeros((1, VP), jnp.float32)
    return emb, stacked, head_w, head_b


def build_causal_mask():
    """Additive block-diagonal causal mask over the flattened (B*S) axis."""
    row = jnp.arange(BS)[:, None]
    col = jnp.arange(BS)[None, :]
    allowed = (row // S == col // S) & (col <= row)
    return jnp.where(allowed, 0.0, NEG_INF).astype(jnp.float32)   # (BS, BS)


# -----------------------------------------------------------------------------
# Forward wrapper: one fused pallas_call (embedding gather happens in-kernel).
# -----------------------------------------------------------------------------
def causal_llm_forward(tokens, emb, mask_add, stacked, head_w, head_b):
    tok_flat = tokens.reshape(-1).astype(jnp.int32)               # (BS,)

    def const_spec(p):
        nd = p.ndim
        return pl.BlockSpec(p.shape, lambda i, tok, _nd=nd: (0,) * _nd)

    in_specs = ([const_spec(emb), const_spec(mask_add)]
                + [const_spec(p) for p in stacked]
                + [const_spec(head_w), const_spec(head_b)])

    logits_padded = pl.pallas_call(
        fused_llm_kernel,
        out_shape=jax.ShapeDtypeStruct((BS, VP), jnp.float32),
        grid_spec=pltpu.PrefetchScalarGridSpec(
            num_scalar_prefetch=1,                 # tokens -> SMEM
            grid=(1,),                             # single step; no layer grid
            in_specs=in_specs,
            out_specs=pl.BlockSpec((BS, VP), lambda i, tok: (0, 0)),
            scratch_shapes=[pltpu.VMEM((BS, D), jnp.float32)]),   # gathered x
        compiler_params=pltpu.CompilerParams(
            dimension_semantics=("arbitrary",)),
    )(tok_flat, emb, mask_add, *stacked, head_w, head_b)

    return logits_padded.reshape(B, S, VP)[:, :, :V]              # (B, S, V)


if __name__ == "__main__":
    key = jax.random.PRNGKey(0)
    k_tok, k_param = jax.random.split(key)

    tokens = jax.random.randint(k_tok, (B, S), 0, V, dtype=jnp.int32)
    emb, stacked, head_w, head_b = init_params(k_param)
    mask_add = build_causal_mask()

    logits = causal_llm_forward(tokens, emb, mask_add, stacked, head_w, head_b)
    jax.block_until_ready(logits)

    assert logits.shape == (B, S, V), logits.shape
    assert logits.dtype == jnp.float32
    assert bool(jnp.all(jnp.isfinite(logits)))
    print("KERNEL_OK")
</pallas_src>

<mosaic_0001>
module attributes {stable_mosaic.version = 11 : i64} {
  func.func @fused_llm_kernel(%arg0: i32, %arg1: memref<16xi32, #tpu.memory_space<smem>>, %arg2: memref<64x32xf32, #tpu.memory_space<vmem>>, %arg3: memref<16x16xf32, #tpu.memory_space<vmem>>, %arg4: memref<2x1x32xf32, #tpu.memory_space<vmem>>, %arg5: memref<2x1x32xf32, #tpu.memory_space<vmem>>, %arg6: memref<2x32x96xbf16, #tpu.memory_space<vmem>>, %arg7: memref<2x1x96xf32, #tpu.memory_space<vmem>>, %arg8: memref<2x32x32xbf16, #tpu.memory_space<vmem>>, %arg9: memref<2x1x32xf32, #tpu.memory_space<vmem>>, %arg10: memref<2x1x32xf32, #tpu.memory_space<vmem>>, %arg11: memref<2x1x32xf32, #tpu.memory_space<vmem>>, %arg12: memref<2x32x128xbf16, #tpu.memory_space<vmem>>, %arg13: memref<2x1x128xf32, #tpu.memory_space<vmem>>, %arg14: memref<2x128x32xbf16, #tpu.memory_space<vmem>>, %arg15: memref<2x1x32xf32, #tpu.memory_space<vmem>>, %arg16: memref<32x128xbf16, #tpu.memory_space<vmem>>, %arg17: memref<1x128xf32, #tpu.memory_space<vmem>>, %arg18: memref<16x128xf32, #tpu.memory_space<vmem>>, %arg19: memref<16x32xf32, #tpu.memory_space<vmem>>) attributes {dimension_semantics = [#tpu.dimension_semantics<arbitrary>], iteration_bounds = array<i64: 1>, scalar_prefetch = 1 : i64, scratch_operands = 1 : i64, tpu.core_type = #tpu.core_type<tc>, window_params = [{pipeline_mode = #tpu.pipeline_mode<synchronous>, transform_indices = @transform_0, window_bounds = array<i64: 64, 32>}, {pipeline_mode = #tpu.pipeline_mode<synchronous>, transform_indices = @transform_1, window_bounds = array<i64: 16, 16>}, {pipeline_mode = #tpu.pipeline_mode<synchronous>, transform_indices = @transform_2, window_bounds = array<i64: 2, 1, 32>}, {pipeline_mode = #tpu.pipeline_mode<synchronous>, transform_indices = @transform_3, window_bounds = array<i64: 2, 1, 32>}, {pipeline_mode = #tpu.pipeline_mode<synchronous>, transform_indices = @transform_4, window_bounds = array<i64: 2, 32, 96>}, {pipeline_mode = #tpu.pipeline_mode<synchronous>, transform_indices = @transform_5, window_bounds = array<i64: 2, 1, 96>}, {pipeline_mode = #tpu.pipeline_mode<synchronous>, transform_indices = @transform_6, window_bounds = array<i64: 2, 32, 32>}, {pipeline_mode = #tpu.pipeline_mode<synchronous>, transform_indices = @transform_7, window_bounds = array<i64: 2, 1, 32>}, {pipeline_mode = #tpu.pipeline_mode<synchronous>, transform_indices = @transform_8, window_bounds = array<i64: 2, 1, 32>}, {pipeline_mode = #tpu.pipeline_mode<synchronous>, transform_indices = @transform_9, window_bounds = array<i64: 2, 1, 32>}, {pipeline_mode = #tpu.pipeline_mode<synchronous>, transform_indices = @transform_10, window_bounds = array<i64: 2, 32, 128>}, {pipeline_mode = #tpu.pipeline_mode<synchronous>, transform_indices = @transform_11, window_bounds = array<i64: 2, 1, 128>}, {pipeline_mode = #tpu.pipeline_mode<synchronous>, transform_indices = @transform_12, window_bounds = array<i64: 2, 128, 32>}, {pipeline_mode = #tpu.pipeline_mode<synchronous>, transform_indices = @transform_13, window_bounds = array<i64: 2, 1, 32>}, {pipeline_mode = #tpu.pipeline_mode<synchronous>, transform_indices = @transform_14, window_bounds = array<i64: 32, 128>}, {pipeline_mode = #tpu.pipeline_mode<synchronous>, transform_indices = @transform_15, window_bounds = array<i64: 1, 128>}, {pipeline_mode = #tpu.pipeline_mode<synchronous>, transform_indices = @transform_16, window_bounds = array<i64: 16, 128>}]} {
    %c0 = arith.constant 0 : index
    %0 = memref.load %arg1[%c0] : memref<16xi32, #tpu.memory_space<smem>>
    %1 = arith.index_cast %0 : i32 to index
    %c0_0 = arith.constant 0 : index
    %2 = vector.load %arg2[%1, %c0_0] : memref<64x32xf32, #tpu.memory_space<vmem>>, vector<1x32xf32>
    %c0_1 = arith.constant 0 : index
    %c0_2 = arith.constant 0 : index
    %3 = vector.load %arg19[%c0_1, %c0_2] : memref<16x32xf32, #tpu.memory_space<vmem>>, vector<1x32xf32>
    tpu.vector_store %arg19[%c0_1, %c0_2], %2 {strides = array<i32>} : memref<16x32xf32, #tpu.memory_space<vmem>>, vector<1x32xf32>,
    %c1 = arith.constant 1 : index
    %4 = memref.load %arg1[%c1] : memref<16xi32, #tpu.memory_space<smem>>
    %5 = arith.index_cast %4 : i32 to index
    %c0_3 = arith.constant 0 : index
    %6 = vector.load %arg2[%5, %c0_3] : memref<64x32xf32, #tpu.memory_space<vmem>>, vector<1x32xf32>
    %c1_4 = arith.constant 1 : index
    %c0_5 = arith.constant 0 : index
    %7 = vector.load %arg19[%c1_4, %c0_5] : memref<16x32xf32, #tpu.memory_space<vmem>>, vector<1x32xf32>
    tpu.vector_store %arg19[%c1_4, %c0_5], %6 {strides = array<i32>} : memref<16x32xf32, #tpu.memory_space<vmem>>, vector<1x32xf32>,
    %c2 = arith.constant 2 : index
    %8 = memref.load %arg1[%c2] : memref<16xi32, #tpu.memory_space<smem>>
    %9 = arith.index_cast %8 : i32 to index
    %c0_6 = arith.constant 0 : index
    %10 = vector.load %arg2[%9, %c0_6] : memref<64x32xf32, #tpu.memory_space<vmem>>, vector<1x32xf32>
    %c2_7 = arith.constant 2 : index
    %c0_8 = arith.constant 0 : index
    %11 = vector.load %arg19[%c2_7, %c0_8] : memref<16x32xf32, #tpu.memory_space<vmem>>, vector<1x32xf32>
    tpu.vector_store %arg19[%c2_7, %c0_8], %10 {strides = array<i32>} : memref<16x32xf32, #tpu.memory_space<vmem>>, vector<1x32xf32>,
    %c3 = arith.constant 3 : index
    %12 = memref.load %arg1[%c3] : memref<16xi32, #tpu.memory_space<smem>>
    %13 = arith.index_cast %12 : i32 to index
    %c0_9 = arith.constant 0 : index
    %14 = vector.load %arg2[%13, %c0_9] : memref<64x32xf32, #tpu.memory_space<vmem>>, vector<1x32xf32>
    %c3_10 = arith.constant 3 : index
    %c0_11 = arith.constant 0 : index
    %15 = vector.load %arg19[%c3_10, %c0_11] : memref<16x32xf32, #tpu.memory_space<vmem>>, vector<1x32xf32>
    tpu.vector_store %arg19[%c3_10, %c0_11], %14 {strides = array<i32>} : memref<16x32xf32, #tpu.memory_space<vmem>>, vector<1x32xf32>,
    %c4 = arith.constant 4 : index
    %16 = memref.load %arg1[%c4] : memref<16xi32, #tpu.memory_space<smem>>
    %17 = arith.index_cast %16 : i32 to index
    %c0_12 = arith.constant 0 : index
    %18 = vector.load %arg2[%17, %c0_12] : memref<64x32xf32, #tpu.memory_space<vmem>>, vector<1x32xf32>
    %c4_13 = arith.constant 4 : index
    %c0_14 = arith.constant 0 : index
    %19 = vector.load %arg19[%c4_13, %c0_14] : memref<16x32xf32, #tpu.memory_space<vmem>>, vector<1x32xf32>
    tpu.vector_store %arg19[%c4_13, %c0_14], %18 {strides = array<i32>} : memref<16x32xf32, #tpu.memory_space<vmem>>, vector<1x32xf32>,
    %c5 = arith.constant 5 : index
    %20 = memref.load %arg1[%c5] : memref<16xi32, #tpu.memory_space<smem>>
    %21 = arith.index_cast %20 : i32 to index
    %c0_15 = arith.constant 0 : index
    %22 = vector.load %arg2[%21, %c0_15] : memref<64x32xf32, #tpu.memory_space<vmem>>, vector<1x32xf32>
    %c5_16 = arith.constant 5 : index
    %c0_17 = arith.constant 0 : index
    %23 = vector.load %arg19[%c5_16, %c0_17] : memref<16x32xf32, #tpu.memory_space<vmem>>, vector<1x32xf32>
    tpu.vector_store %arg19[%c5_16, %c0_17], %22 {strides = array<i32>} : memref<16x32xf32, #tpu.memory_space<vmem>>, vector<1x32xf32>,
    %c6 = arith.constant 6 : index
    %24 = memref.load %arg1[%c6] : memref<16xi32, #tpu.memory_space<smem>>
    %25 = arith.index_cast %24 : i32 to index
    %c0_18 = arith.constant 0 : index
    %26 = vector.load %arg2[%25, %c0_18] : memref<64x32xf32, #tpu.memory_space<vmem>>, vector<1x32xf32>
    %c6_19 = arith.constant 6 : index
    %c0_20 = arith.constant 0 : index
    %27 = vector.load %arg19[%c6_19, %c0_20] : memref<16x32xf32, #tpu.memory_space<vmem>>, vector<1x32xf32>
    tpu.vector_store %arg19[%c6_19, %c0_20], %26 {strides = array<i32>} : memref<16x32xf32, #tpu.memory_space<vmem>>, vector<1x32xf32>,
    %c7 = arith.constant 7 : index
    %28 = memref.load %arg1[%c7] : memref<16xi32, #tpu.memory_space<smem>>
    %29 = arith.index_cast %28 : i32 to index
    %c0_21 = arith.constant 0 : index
    %30 = vector.load %arg2[%29, %c0_21] : memref<64x32xf32, #tpu.memory_space<vmem>>, vector<1x32xf32>
    %c7_22 = arith.constant 7 : index
    %c0_23 = arith.constant 0 : index
    %31 = vector.load %arg19[%c7_22, %c0_23] : memref<16x32xf32, #tpu.memory_space<vmem>>, vector<1x32xf32>
    tpu.vector_store %arg19[%c7_22, %c0_23], %30 {strides = array<i32>} : memref<16x32xf32, #tpu.memory_space<vmem>>, vector<1x32xf32>,
    %c8 = arith.constant 8 : index
    %32 = memref.load %arg1[%c8] : memref<16xi32, #tpu.memory_space<smem>>
    %33 = arith.index_cast %32 : i32 to index
    %c0_24 = arith.constant 0 : index
    %34 = vector.load %arg2[%33, %c0_24] : memref<64x32xf32, #tpu.memory_space<vmem>>, vector<1x32xf32>
    %c8_25 = arith.constant 8 : index
    %c0_26 = arith.constant 0 : index
    %35 = vector.load %arg19[%c8_25, %c0_26] : memref<16x32xf32, #tpu.memory_space<vmem>>, vector<1x32xf32>
    tpu.vector_store %arg19[%c8_25, %c0_26], %34 {strides = array<i32>} : memref<16x32xf32, #tpu.memory_space<vmem>>, vector<1x32xf32>,
    %c9 = arith.constant 9 : index
    %36 = memref.load %arg1[%c9] : memref<16xi32, #tpu.memory_space<smem>>
    %37 = arith.index_cast %36 : i32 to index
    %c0_27 = arith.constant 0 : index
    %38 = vector.load %arg2[%37, %c0_27] : memref<64x32xf32, #tpu.memory_space<vmem>>, vector<1x32xf32>
    %c9_28 = arith.constant 9 : index
    %c0_29 = arith.constant 0 : index
    %39 = vector.load %arg19[%c9_28, %c0_29] : memref<16x32xf32, #tpu.memory_space<vmem>>, vector<1x32xf32>
    tpu.vector_store %arg19[%c9_28, %c0_29], %38 {strides = array<i32>} : memref<16x32xf32, #tpu.memory_space<vmem>>, vector<1x32xf32>,
    %c10 = arith.constant 10 : index
    %40 = memref.load %arg1[%c10] : memref<16xi32, #tpu.memory_space<smem>>
    %41 = arith.index_cast %40 : i32 to index
    %c0_30 = arith.constant 0 : index
    %42 = vector.load %arg2[%41, %c0_30] : memref<64x32xf32, #tpu.memory_space<vmem>>, vector<1x32xf32>
    %c10_31 = arith.constant 10 : index
    %c0_32 = arith.constant 0 : index
    %43 = vector.load %arg19[%c10_31, %c0_32] : memref<16x32xf32, #tpu.memory_space<vmem>>, vector<1x32xf32>
    tpu.vector_store %arg19[%c10_31, %c0_32], %42 {strides = array<i32>} : memref<16x32xf32, #tpu.memory_space<vmem>>, vector<1x32xf32>,
    %c11 = arith.constant 11 : index
    %44 = memref.load %arg1[%c11] : memref<16xi32, #tpu.memory_space<smem>>
    %45 = arith.index_cast %44 : i32 to index
    %c0_33 = arith.constant 0 : index
    %46 = vector.load %arg2[%45, %c0_33] : memref<64x32xf32, #tpu.memory_space<vmem>>, vector<1x32xf32>
    %c11_34 = arith.constant 11 : index
    %c0_35 = arith.constant 0 : index
    %47 = vector.load %arg19[%c11_34, %c0_35] : memref<16x32xf32, #tpu.memory_space<vmem>>, vector<1x32xf32>
    tpu.vector_store %arg19[%c11_34, %c0_35], %46 {strides = array<i32>} : memref<16x32xf32, #tpu.memory_space<vmem>>, vector<1x32xf32>,
    %c12 = arith.constant 12 : index
    %48 = memref.load %arg1[%c12] : memref<16xi32, #tpu.memory_space<smem>>
    %49 = arith.index_cast %48 : i32 to index
    %c0_36 = arith.constant 0 : index
    %50 = vector.load %arg2[%49, %c0_36] : memref<64x32xf32, #tpu.memory_space<vmem>>, vector<1x32xf32>
    %c12_37 = arith.constant 12 : index
    %c0_38 = arith.constant 0 : index
    %51 = vector.load %arg19[%c12_37, %c0_38] : memref<16x32xf32, #tpu.memory_space<vmem>>, vector<1x32xf32>
    tpu.vector_store %arg19[%c12_37, %c0_38], %50 {strides = array<i32>} : memref<16x32xf32, #tpu.memory_space<vmem>>, vector<1x32xf32>,
    %c13 = arith.constant 13 : index
    %52 = memref.load %arg1[%c13] : memref<16xi32, #tpu.memory_space<smem>>
    %53 = arith.index_cast %52 : i32 to index
    %c0_39 = arith.constant 0 : index
    %54 = vector.load %arg2[%53, %c0_39] : memref<64x32xf32, #tpu.memory_space<vmem>>, vector<1x32xf32>
    %c13_40 = arith.constant 13 : index
    %c0_41 = arith.constant 0 : index
    %55 = vector.load %arg19[%c13_40, %c0_41] : memref<16x32xf32, #tpu.memory_space<vmem>>, vector<1x32xf32>
    tpu.vector_store %arg19[%c13_40, %c0_41], %54 {strides = array<i32>} : memref<16x32xf32, #tpu.memory_space<vmem>>, vector<1x32xf32>,
    %c14 = arith.constant 14 : index
    %56 = memref.load %arg1[%c14] : memref<16xi32, #tpu.memory_space<smem>>
    %57 = arith.index_cast %56 : i32 to index
    %c0_42 = arith.constant 0 : index
    %58 = vector.load %arg2[%57, %c0_42] : memref<64x32xf32, #tpu.memory_space<vmem>>, vector<1x32xf32>
    %c14_43 = arith.constant 14 : index
    %c0_44 = arith.constant 0 : index
    %59 = vector.load %arg19[%c14_43, %c0_44] : memref<16x32xf32, #tpu.memory_space<vmem>>, vector<1x32xf32>
    tpu.vector_store %arg19[%c14_43, %c0_44], %58 {strides = array<i32>} : memref<16x32xf32, #tpu.memory_space<vmem>>, vector<1x32xf32>,
    %c15 = arith.constant 15 : index
    %60 = memref.load %arg1[%c15] : memref<16xi32, #tpu.memory_space<smem>>
    %61 = arith.index_cast %60 : i32 to index
    %c0_45 = arith.constant 0 : index
    %62 = vector.load %arg2[%61, %c0_45] : memref<64x32xf32, #tpu.memory_space<vmem>>, vector<1x32xf32>
    %c15_46 = arith.constant 15 : index
    %c0_47 = arith.constant 0 : index
    %63 = vector.load %arg19[%c15_46, %c0_47] : memref<16x32xf32, #tpu.memory_space<vmem>>, vector<1x32xf32>
    tpu.vector_store %arg19[%c15_46, %c0_47], %62 {strides = array<i32>} : memref<16x32xf32, #tpu.memory_space<vmem>>, vector<1x32xf32>,
    %c0_48 = arith.constant 0 : index
    %c0_49 = arith.constant 0 : index
    %64 = vector.load %arg19[%c0_48, %c0_49] : memref<16x32xf32, #tpu.memory_space<vmem>>, vector<16x32xf32>
    %c0_50 = arith.constant 0 : index
    %c0_51 = arith.constant 0 : index
    %65 = vector.load %arg3[%c0_50, %c0_51] : memref<16x16xf32, #tpu.memory_space<vmem>>, vector<16x16xf32>
    %c0_52 = arith.constant 0 : index
    %c0_53 = arith.constant 0 : index
    %c0_54 = arith.constant 0 : index
    %66 = vector.load %arg4[%c0_52, %c0_53, %c0_54] : memref<2x1x32xf32, #tpu.memory_space<vmem>>, vector<1x1x32xf32>
    %67 = vector.shape_cast %66 : vector<1x1x32xf32> to vector<1x32xf32>
    %c0_55 = arith.constant 0 : index
    %c0_56 = arith.constant 0 : index
    %c0_57 = arith.constant 0 : index
    %68 = vector.load %arg5[%c0_55, %c0_56, %c0_57] : memref<2x1x32xf32, #tpu.memory_space<vmem>>, vector<1x1x32xf32>
    %69 = vector.shape_cast %68 : vector<1x1x32xf32> to vector<1x32xf32>
    %cst = arith.constant dense<0.000000e+00> : vector<16xf32>
    %70 = vector.multi_reduction <add>, %64, %cst [1] : vector<16x32xf32> to vector<16xf32>
    %71 = vector.shape_cast %70 : vector<16xf32> to vector<16x1xf32>
    %cst_58 = arith.constant 3.200000e+01 : f32
    %72 = vector.broadcast %cst_58 : f32 to vector<16x1xf32>
    %73 = arith.divf %71, %72 : vector<16x1xf32>
    %74 = vector.broadcast %73 : vector<16x1xf32> to vector<16x32xf32>
    %75 = arith.subf %64, %74 : vector<16x32xf32>
    %76 = arith.mulf %75, %75 : vector<16x32xf32>
    %cst_59 = arith.constant dense<0.000000e+00> : vector<16xf32>
    %77 = vector.multi_reduction <add>, %76, %cst_59 [1] : vector<16x32xf32> to vector<16xf32>
    %78 = vector.shape_cast %77 : vector<16xf32> to vector<16x1xf32>
    %cst_60 = arith.constant 3.200000e+01 : f32
    %79 = vector.broadcast %cst_60 : f32 to vector<16x1xf32>
    %80 = arith.divf %78, %79 : vector<16x1xf32>
    %81 = vector.broadcast %73 : vector<16x1xf32> to vector<16x32xf32>
    %82 = arith.subf %64, %81 : vector<16x32xf32>
    %cst_61 = arith.constant 9.99999974E-6 : f32
    %83 = vector.broadcast %cst_61 : f32 to vector<16x1xf32>
    %84 = arith.addf %80, %83 : vector<16x1xf32>
    %85 = math.rsqrt %84 : vector<16x1xf32>
    %86 = vector.broadcast %85 : vector<16x1xf32> to vector<16x32xf32>
    %87 = arith.mulf %82, %86 : vector<16x32xf32>
    %88 = vector.broadcast %67 : vector<1x32xf32> to vector<16x32xf32>
    %89 = arith.mulf %87, %88 : vector<16x32xf32>
    %90 = vector.broadcast %69 : vector<1x32xf32> to vector<16x32xf32>
    %91 = arith.addf %89, %90 : vector<16x32xf32>
    %92 = arith.truncf %91 : vector<16x32xf32> to vector<16x32xbf16>
    %c0_62 = arith.constant 0 : index
    %c0_63 = arith.constant 0 : index
    %c0_64 = arith.constant 0 : index
    %93 = vector.load %arg6[%c0_62, %c0_63, %c0_64] : memref<2x32x96xbf16, #tpu.memory_space<vmem>>, vector<1x32x96xbf16>
    %94 = vector.shape_cast %93 : vector<1x32x96xbf16> to vector<32x96xbf16>
    %cst_65 = arith.constant dense<0.000000e+00> : vector<16x96xf32>
    %95 = tpu.matmul %92, %94, %cst_65 {dimension_numbers = #tpu.dot_dimension_numbers<[1], [0], [0], [1], [0, 0, 1, 1], [], []>} : vector<16x32xbf16>, vector<32x96xbf16>, vector<16x96xf32> -> vector<16x96xf32>
    %c0_66 = arith.constant 0 : index
    %c0_67 = arith.constant 0 : index
    %c0_68 = arith.constant 0 : index
    %96 = vector.load %arg7[%c0_66, %c0_67, %c0_68] : memref<2x1x96xf32, #tpu.memory_space<vmem>>, vector<1x1x96xf32>
    %97 = vector.shape_cast %96 : vector<1x1x96xf32> to vector<1x96xf32>
    %98 = vector.broadcast %97 : vector<1x96xf32> to vector<16x96xf32>
    %99 = arith.addf %95, %98 : vector<16x96xf32>
    %c0_69 = arith.constant 0 : index
    %c0_70 = arith.constant 0 : index
    %c0_71 = arith.constant 0 : index
    %100 = vector.load %arg8[%c0_69, %c0_70, %c0_71] : memref<2x32x32xbf16, #tpu.memory_space<vmem>>, vector<1x32x32xbf16>
    %101 = vector.shape_cast %100 : vector<1x32x32xbf16> to vector<32x32xbf16>
    %cst_72 = arith.constant 0.000000e+00 : f32
    %102 = vector.broadcast %cst_72 : f32 to vector<16x32xf32>
    %103 = vector.extract_strided_slice %99 {offsets = [0, 0], sizes = [16, 16], strides = [1, 1]} : vector<16x96xf32> to vector<16x16xf32>
    %104 = arith.truncf %103 : vector<16x16xf32> to vector<16x16xbf16>
    %105 = vector.extract_strided_slice %99 {offsets = [0, 32], sizes = [16, 16], strides = [1, 1]} : vector<16x96xf32> to vector<16x16xf32>
    %106 = arith.truncf %105 : vector<16x16xf32> to vector<16x16xbf16>
    %107 = vector.extract_strided_slice %99 {offsets = [0, 64], sizes = [16, 16], strides = [1, 1]} : vector<16x96xf32> to vector<16x16xf32>
    %108 = arith.truncf %107 : vector<16x16xf32> to vector<16x16xbf16>
    %cst_73 = arith.constant dense<0.000000e+00> : vector<16x16xf32>
    %109 = tpu.matmul %104, %106, %cst_73 {dimension_numbers = #tpu.dot_dimension_numbers<[1], [1], [0], [0], [0, 0, 1, 0], [], []>} : vector<16x16xbf16>, vector<16x16xbf16>, vector<16x16xf32> -> vector<16x16xf32>
    %110 = arith.addf %109, %65 : vector<16x16xf32>
    %cst_74 = arith.constant dense<0xFF800000> : vector<16xf32>
    %111 = vector.multi_reduction <maximumf>, %110, %cst_74 [1] : vector<16x16xf32> to vector<16xf32>
    %112 = vector.shape_cast %111 : vector<16xf32> to vector<16x1xf32>
    %113 = vector.broadcast %112 : vector<16x1xf32> to vector<16x16xf32>
    %114 = arith.subf %110, %113 : vector<16x16xf32>
    %115 = math.exp %114 : vector<16x16xf32>
    %cst_75 = arith.constant dense<0.000000e+00> : vector<16xf32>
    %116 = vector.multi_reduction <add>, %115, %cst_75 [1] : vector<16x16xf32> to vector<16xf32>
    %117 = vector.shape_cast %116 : vector<16xf32> to vector<16x1xf32>
    %118 = tpu.reciprocal %117 {approx = true} : vector<16x1xf32> -> vector<16x1xf32>
    %119 = vector.broadcast %118 : vector<16x1xf32> to vector<16x16xf32>
    %120 = arith.mulf %115, %119 : vector<16x16xf32>
    %121 = arith.truncf %120 : vector<16x16xf32> to vector<16x16xbf16>
    %cst_76 = arith.constant dense<0.000000e+00> : vector<16x16xf32>
    %122 = tpu.matmul %121, %108, %cst_76 {dimension_numbers = #tpu.dot_dimension_numbers<[1], [0], [0], [1], [0, 0, 1, 1], [], []>} : vector<16x16xbf16>, vector<16x16xbf16>, vector<16x16xf32> -> vector<16x16xf32>
    %123 = arith.truncf %122 : vector<16x16xf32> to vector<16x16xbf16>
    %124 = vector.extract_strided_slice %101 {offsets = [0, 0], sizes = [16, 32], strides = [1, 1]} : vector<32x32xbf16> to vector<16x32xbf16>
    %cst_77 = arith.constant dense<0.000000e+00> : vector<16x32xf32>
    %125 = tpu.matmul %123, %124, %cst_77 {dimension_numbers = #tpu.dot_dimension_numbers<[1], [0], [0], [1], [0, 0, 1, 1], [], []>} : vector<16x16xbf16>, vector<16x32xbf16>, vector<16x32xf32> -> vector<16x32xf32>
    %126 = arith.addf %102, %125 : vector<16x32xf32>
    %127 = vector.extract_strided_slice %99 {offsets = [0, 16], sizes = [16, 16], strides = [1, 1]} : vector<16x96xf32> to vector<16x16xf32>
    %128 = arith.truncf %127 : vector<16x16xf32> to vector<16x16xbf16>
    %129 = vector.extract_strided_slice %99 {offsets = [0, 48], sizes = [16, 16], strides = [1, 1]} : vector<16x96xf32> to vector<16x16xf32>
    %130 = arith.truncf %129 : vector<16x16xf32> to vector<16x16xbf16>
    %131 = vector.extract_strided_slice %99 {offsets = [0, 80], sizes = [16, 16], strides = [1, 1]} : vector<16x96xf32> to vector<16x16xf32>
    %132 = arith.truncf %131 : vector<16x16xf32> to vector<16x16xbf16>
    %cst_78 = arith.constant dense<0.000000e+00> : vector<16x16xf32>
    %133 = tpu.matmul %128, %130, %cst_78 {dimension_numbers = #tpu.dot_dimension_numbers<[1], [1], [0], [0], [0, 0, 1, 0], [], []>} : vector<16x16xbf16>, vector<16x16xbf16>, vector<16x16xf32> -> vector<16x16xf32>
    %134 = arith.addf %133, %65 : vector<16x16xf32>
    %cst_79 = arith.constant dense<0xFF800000> : vector<16xf32>
    %135 = vector.multi_reduction <maximumf>, %134, %cst_79 [1] : vector<16x16xf32> to vector<16xf32>
    %136 = vector.shape_cast %135 : vector<16xf32> to vector<16x1xf32>
    %137 = vector.broadcast %136 : vector<16x1xf32> to vector<16x16xf32>
    %138 = arith.subf %134, %137 : vector<16x16xf32>
    %139 = math.exp %138 : vector<16x16xf32>
    %cst_80 = arith.constant dense<0.000000e+00> : vector<16xf32>
    %140 = vector.multi_reduction <add>, %139, %cst_80 [1] : vector<16x16xf32> to vector<16xf32>
    %141 = vector.shape_cast %140 : vector<16xf32> to vector<16x1xf32>
    %142 = tpu.reciprocal %141 {approx = true} : vector<16x1xf32> -> vector<16x1xf32>
    %143 = vector.broadcast %142 : vector<16x1xf32> to vector<16x16xf32>
    %144 = arith.mulf %139, %143 : vector<16x16xf32>
    %145 = arith.truncf %144 : vector<16x16xf32> to vector<16x16xbf16>
    %cst_81 = arith.constant dense<0.000000e+00> : vector<16x16xf32>
    %146 = tpu.matmul %145, %132, %cst_81 {dimension_numbers = #tpu.dot_dimension_numbers<[1], [0], [0], [1], [0, 0, 1, 1], [], []>} : vector<16x16xbf16>, vector<16x16xbf16>, vector<16x16xf32> -> vector<16x16xf32>
    %147 = arith.truncf %146 : vector<16x16xf32> to vector<16x16xbf16>
    %148 = vector.extract_strided_slice %101 {offsets = [16, 0], sizes = [16, 32], strides = [1, 1]} : vector<32x32xbf16> to vector<16x32xbf16>
    %cst_82 = arith.constant dense<0.000000e+00> : vector<16x32xf32>
    %149 = tpu.matmul %147, %148, %cst_82 {dimension_numbers = #tpu.dot_dimension_numbers<[1], [0], [0], [1], [0, 0, 1, 1], [], []>} : vector<16x16xbf16>, vector<16x32xbf16>, vector<16x32xf32> -> vector<16x32xf32>
    %150 = arith.addf %126, %149 : vector<16x32xf32>
    %151 = arith.addf %64, %150 : vector<16x32xf32>
    %c0_83 = arith.constant 0 : index
    %c0_84 = arith.constant 0 : index
    %c0_85 = arith.constant 0 : index
    %152 = vector.load %arg9[%c0_83, %c0_84, %c0_85] : memref<2x1x32xf32, #tpu.memory_space<vmem>>, vector<1x1x32xf32>
    %153 = vector.shape_cast %152 : vector<1x1x32xf32> to vector<1x32xf32>
    %154 = vector.broadcast %153 : vector<1x32xf32> to vector<16x32xf32>
    %155 = arith.addf %151, %154 : vector<16x32xf32>
    %c0_86 = arith.constant 0 : index
    %c0_87 = arith.constant 0 : index
    %c0_88 = arith.constant 0 : index
    %156 = vector.load %arg10[%c0_86, %c0_87, %c0_88] : memref<2x1x32xf32, #tpu.memory_space<vmem>>, vector<1x1x32xf32>
    %157 = vector.shape_cast %156 : vector<1x1x32xf32> to vector<1x32xf32>
    %c0_89 = arith.constant 0 : index
    %c0_90 = arith.constant 0 : index
    %c0_91 = arith.constant 0 : index
    %158 = vector.load %arg11[%c0_89, %c0_90, %c0_91] : memref<2x1x32xf32, #tpu.memory_space<vmem>>, vector<1x1x32xf32>
    %159 = vector.shape_cast %158 : vector<1x1x32xf32> to vector<1x32xf32>
    %cst_92 = arith.constant dense<0.000000e+00> : vector<16xf32>
    %160 = vector.multi_reduction <add>, %155, %cst_92 [1] : vector<16x32xf32> to vector<16xf32>
    %161 = vector.shape_cast %160 : vector<16xf32> to vector<16x1xf32>
    %cst_93 = arith.constant 3.200000e+01 : f32
    %162 = vector.broadcast %cst_93 : f32 to vector<16x1xf32>
    %163 = arith.divf %161, %162 : vector<16x1xf32>
    %164 = vector.broadcast %163 : vector<16x1xf32> to vector<16x32xf32>
    %165 = arith.subf %155, %164 : vector<16x32xf32>
    %166 = arith.mulf %165, %165 : vector<16x32xf32>
    %cst_94 = arith.constant dense<0.000000e+00> : vector<16xf32>
    %167 = vector.multi_reduction <add>, %166, %cst_94 [1] : vector<16x32xf32> to vector<16xf32>
    %168 = vector.shape_cast %167 : vector<16xf32> to vector<16x1xf32>
    %cst_95 = arith.constant 3.200000e+01 : f32
    %169 = vector.broadcast %cst_95 : f32 to vector<16x1xf32>
    %170 = arith.divf %168, %169 : vector<16x1xf32>
    %171 = vector.broadcast %163 : vector<16x1xf32> to vector<16x32xf32>
    %172 = arith.subf %155, %171 : vector<16x32xf32>
    %cst_96 = arith.constant 9.99999974E-6 : f32
    %173 = vector.broadcast %cst_96 : f32 to vector<16x1xf32>
    %174 = arith.addf %170, %173 : vector<16x1xf32>
    %175 = math.rsqrt %174 : vector<16x1xf32>
    %176 = vector.broadcast %175 : vector<16x1xf32> to vector<16x32xf32>
    %177 = arith.mulf %172, %176 : vector<16x32xf32>
    %178 = vector.broadcast %157 : vector<1x32xf32> to vector<16x32xf32>
    %179 = arith.mulf %177, %178 : vector<16x32xf32>
    %180 = vector.broadcast %159 : vector<1x32xf32> to vector<16x32xf32>
    %181 = arith.addf %179, %180 : vector<16x32xf32>
    %182 = arith.truncf %181 : vector<16x32xf32> to vector<16x32xbf16>
    %c0_97 = arith.constant 0 : index
    %c0_98 = arith.constant 0 : index
    %c0_99 = arith.constant 0 : index
    %183 = vector.load %arg12[%c0_97, %c0_98, %c0_99] : memref<2x32x128xbf16, #tpu.memory_space<vmem>>, vector<1x32x128xbf16>
    %184 = vector.shape_cast %183 : vector<1x32x128xbf16> to vector<32x128xbf16>
    %cst_100 = arith.constant dense<0.000000e+00> : vector<16x128xf32>
    %185 = tpu.matmul %182, %184, %cst_100 {dimension_numbers = #tpu.dot_dimension_numbers<[1], [0], [0], [1], [0, 0, 1, 1], [], []>} : vector<16x32xbf16>, vector<32x128xbf16>, vector<16x128xf32> -> vector<16x128xf32>
    %c0_101 = arith.constant 0 : index
    %c0_102 = arith.constant 0 : index
    %c0_103 = arith.constant 0 : index
    %186 = vector.load %arg13[%c0_101, %c0_102, %c0_103] : memref<2x1x128xf32, #tpu.memory_space<vmem>>, vector<1x1x128xf32>
    %187 = vector.shape_cast %186 : vector<1x1x128xf32> to vector<1x128xf32>
    %188 = vector.broadcast %187 : vector<1x128xf32> to vector<16x128xf32>
    %189 = arith.addf %185, %188 : vector<16x128xf32>
    %190 = arith.mulf %189, %189 : vector<16x128xf32>
    %191 = arith.mulf %189, %190 : vector<16x128xf32>
    %cst_104 = arith.constant 4.471500e-02 : f32
    %192 = vector.broadcast %cst_104 : f32 to vector<16x128xf32>
    %193 = arith.mulf %192, %191 : vector<16x128xf32>
    %194 = arith.addf %189, %193 : vector<16x128xf32>
    %cst_105 = arith.constant 0.797884583 : f32
    %195 = vector.broadcast %cst_105 : f32 to vector<16x128xf32>
    %196 = arith.mulf %195, %194 : vector<16x128xf32>
    %197 = math.tanh %196 : vector<16x128xf32>
    %cst_106 = arith.constant 1.000000e+00 : f32
    %198 = vector.broadcast %cst_106 : f32 to vector<16x128xf32>
    %199 = arith.addf %198, %197 : vector<16x128xf32>
    %cst_107 = arith.constant 5.000000e-01 : f32
    %200 = vector.broadcast %cst_107 : f32 to vector<16x128xf32>
    %201 = arith.mulf %200, %199 : vector<16x128xf32>
    %202 = arith.mulf %189, %201 : vector<16x128xf32>
    %203 = arith.truncf %202 : vector<16x128xf32> to vector<16x128xbf16>
    %c0_108 = arith.constant 0 : index
    %c0_109 = arith.constant 0 : index
    %c0_110 = arith.constant 0 : index
    %204 = vector.load %arg14[%c0_108, %c0_109, %c0_110] : memref<2x128x32xbf16, #tpu.memory_space<vmem>>, vector<1x128x32xbf16>
    %205 = vector.shape_cast %204 : vector<1x128x32xbf16> to vector<128x32xbf16>
    %cst_111 = arith.constant dense<0.000000e+00> : vector<16x32xf32>
    %206 = tpu.matmul %203, %205, %cst_111 {dimension_numbers = #tpu.dot_dimension_numbers<[1], [0], [0], [1], [0, 0, 1, 1], [], []>} : vector<16x128xbf16>, vector<128x32xbf16>, vector<16x32xf32> -> vector<16x32xf32>
    %c0_112 = arith.constant 0 : index
    %c0_113 = arith.constant 0 : index
    %c0_114 = arith.constant 0 : index
    %207 = vector.load %arg15[%c0_112, %c0_113, %c0_114] : memref<2x1x32xf32, #tpu.memory_space<vmem>>, vector<1x1x32xf32>
    %208 = vector.shape_cast %207 : vector<1x1x32xf32> to vector<1x32xf32>
    %209 = vector.broadcast %208 : vector<1x32xf32> to vector<16x32xf32>
    %210 = arith.addf %206, %209 : vector<16x32xf32>
    %211 = arith.addf %155, %210 : vector<16x32xf32>
    %c1_115 = arith.constant 1 : index
    %c0_116 = arith.constant 0 : index
    %c0_117 = arith.constant 0 : index
    %212 = vector.load %arg4[%c1_115, %c0_116, %c0_117] : memref<2x1x32xf32, #tpu.memory_space<vmem>>, vector<1x1x32xf32>
    %213 = vector.shape_cast %212 : vector<1x1x32xf32> to vector<1x32xf32>
    %c1_118 = arith.constant 1 : index
    %c0_119 = arith.constant 0 : index
    %c0_120 = arith.constant 0 : index
    %214 = vector.load %arg5[%c1_118, %c0_119, %c0_120] : memref<2x1x32xf32, #tpu.memory_space<vmem>>, vector<1x1x32xf32>
    %215 = vector.shape_cast %214 : vector<1x1x32xf32> to vector<1x32xf32>
    %cst_121 = arith.constant dense<0.000000e+00> : vector<16xf32>
    %216 = vector.multi_reduction <add>, %211, %cst_121 [1] : vector<16x32xf32> to vector<16xf32>
    %217 = vector.shape_cast %216 : vector<16xf32> to vector<16x1xf32>
    %cst_122 = arith.constant 3.200000e+01 : f32
    %218 = vector.broadcast %cst_122 : f32 to vector<16x1xf32>
    %219 = arith.divf %217, %218 : vector<16x1xf32>
    %220 = vector.broadcast %219 : vector<16x1xf32> to vector<16x32xf32>
    %221 = arith.subf %211, %220 : vector<16x32xf32>
    %222 = arith.mulf %221, %221 : vector<16x32xf32>
    %cst_123 = arith.constant dense<0.000000e+00> : vector<16xf32>
    %223 = vector.multi_reduction <add>, %222, %cst_123 [1] : vector<16x32xf32> to vector<16xf32>
    %224 = vector.shape_cast %223 : vector<16xf32> to vector<16x1xf32>
    %cst_124 = arith.constant 3.200000e+01 : f32
    %225 = vector.broadcast %cst_124 : f32 to vector<16x1xf32>
    %226 = arith.divf %224, %225 : vector<16x1xf32>
    %227 = vector.broadcast %219 : vector<16x1xf32> to vector<16x32xf32>
    %228 = arith.subf %211, %227 : vector<16x32xf32>
    %cst_125 = arith.constant 9.99999974E-6 : f32
    %229 = vector.broadcast %cst_125 : f32 to vector<16x1xf32>
    %230 = arith.addf %226, %229 : vector<16x1xf32>
    %231 = math.rsqrt %230 : vector<16x1xf32>
    %232 = vector.broadcast %231 : vector<16x1xf32> to vector<16x32xf32>
    %233 = arith.mulf %228, %232 : vector<16x32xf32>
    %234 = vector.broadcast %213 : vector<1x32xf32> to vector<16x32xf32>
    %235 = arith.mulf %233, %234 : vector<16x32xf32>
    %236 = vector.broadcast %215 : vector<1x32xf32> to vector<16x32xf32>
    %237 = arith.addf %235, %236 : vector<16x32xf32>
    %238 = arith.truncf %237 : vector<16x32xf32> to vector<16x32xbf16>
    %c1_126 = arith.constant 1 : index
    %c0_127 = arith.constant 0 : index
    %c0_128 = arith.constant 0 : index
    %239 = vector.load %arg6[%c1_126, %c0_127, %c0_128] : memref<2x32x96xbf16, #tpu.memory_space<vmem>>, vector<1x32x96xbf16>
    %240 = vector.shape_cast %239 : vector<1x32x96xbf16> to vector<32x96xbf16>
    %cst_129 = arith.constant dense<0.000000e+00> : vector<16x96xf32>
    %241 = tpu.matmul %238, %240, %cst_129 {dimension_numbers = #tpu.dot_dimension_numbers<[1], [0], [0], [1], [0, 0, 1, 1], [], []>} : vector<16x32xbf16>, vector<32x96xbf16>, vector<16x96xf32> -> vector<16x96xf32>
    %c1_130 = arith.constant 1 : index
    %c0_131 = arith.constant 0 : index
    %c0_132 = arith.constant 0 : index
    %242 = vector.load %arg7[%c1_130, %c0_131, %c0_132] : memref<2x1x96xf32, #tpu.memory_space<vmem>>, vector<1x1x96xf32>
    %243 = vector.shape_cast %242 : vector<1x1x96xf32> to vector<1x96xf32>
    %244 = vector.broadcast %243 : vector<1x96xf32> to vector<16x96xf32>
    %245 = arith.addf %241, %244 : vector<16x96xf32>
    %c1_133 = arith.constant 1 : index
    %c0_134 = arith.constant 0 : index
    %c0_135 = arith.constant 0 : index
    %246 = vector.load %arg8[%c1_133, %c0_134, %c0_135] : memref<2x32x32xbf16, #tpu.memory_space<vmem>>, vector<1x32x32xbf16>
    %247 = vector.shape_cast %246 : vector<1x32x32xbf16> to vector<32x32xbf16>
    %cst_136 = arith.constant 0.000000e+00 : f32
    %248 = vector.broadcast %cst_136 : f32 to vector<16x32xf32>
    %249 = vector.extract_strided_slice %245 {offsets = [0, 0], sizes = [16, 16], strides = [1, 1]} : vector<16x96xf32> to vector<16x16xf32>
    %250 = arith.truncf %249 : vector<16x16xf32> to vector<16x16xbf16>
    %251 = vector.extract_strided_slice %245 {offsets = [0, 32], sizes = [16, 16], strides = [1, 1]} : vector<16x96xf32> to vector<16x16xf32>
    %252 = arith.truncf %251 : vector<16x16xf32> to vector<16x16xbf16>
    %253 = vector.extract_strided_slice %245 {offsets = [0, 64], sizes = [16, 16], strides = [1, 1]} : vector<16x96xf32> to vector<16x16xf32>
    %254 = arith.truncf %253 : vector<16x16xf32> to vector<16x16xbf16>
    %cst_137 = arith.constant dense<0.000000e+00> : vector<16x16xf32>
    %255 = tpu.matmul %250, %252, %cst_137 {dimension_numbers = #tpu.dot_dimension_numbers<[1], [1], [0], [0], [0, 0, 1, 0], [], []>} : vector<16x16xbf16>, vector<16x16xbf16>, vector<16x16xf32> -> vector<16x16xf32>
    %256 = arith.addf %255, %65 : vector<16x16xf32>
    %cst_138 = arith.constant dense<0xFF800000> : vector<16xf32>
    %257 = vector.multi_reduction <maximumf>, %256, %cst_138 [1] : vector<16x16xf32> to vector<16xf32>
    %258 = vector.shape_cast %257 : vector<16xf32> to vector<16x1xf32>
    %259 = vector.broadcast %258 : vector<16x1xf32> to vector<16x16xf32>
    %260 = arith.subf %256, %259 : vector<16x16xf32>
    %261 = math.exp %260 : vector<16x16xf32>
    %cst_139 = arith.constant dense<0.000000e+00> : vector<16xf32>
    %262 = vector.multi_reduction <add>, %261, %cst_139 [1] : vector<16x16xf32> to vector<16xf32>
    %263 = vector.shape_cast %262 : vector<16xf32> to vector<16x1xf32>
    %264 = tpu.reciprocal %263 {approx = true} : vector<16x1xf32> -> vector<16x1xf32>
    %265 = vector.broadcast %264 : vector<16x1xf32> to vector<16x16xf32>
    %266 = arith.mulf %261, %265 : vector<16x16xf32>
    %267 = arith.truncf %266 : vector<16x16xf32> to vector<16x16xbf16>
    %cst_140 = arith.constant dense<0.000000e+00> : vector<16x16xf32>
    %268 = tpu.matmul %267, %254, %cst_140 {dimension_numbers = #tpu.dot_dimension_numbers<[1], [0], [0], [1], [0, 0, 1, 1], [], []>} : vector<16x16xbf16>, vector<16x16xbf16>, vector<16x16xf32> -> vector<16x16xf32>
    %269 = arith.truncf %268 : vector<16x16xf32> to vector<16x16xbf16>
    %270 = vector.extract_strided_slice %247 {offsets = [0, 0], sizes = [16, 32], strides = [1, 1]} : vector<32x32xbf16> to vector<16x32xbf16>
    %cst_141 = arith.constant dense<0.000000e+00> : vector<16x32xf32>
    %271 = tpu.matmul %269, %270, %cst_141 {dimension_numbers = #tpu.dot_dimension_numbers<[1], [0], [0], [1], [0, 0, 1, 1], [], []>} : vector<16x16xbf16>, vector<16x32xbf16>, vector<16x32xf32> -> vector<16x32xf32>
    %272 = arith.addf %248, %271 : vector<16x32xf32>
    %273 = vector.extract_strided_slice %245 {offsets = [0, 16], sizes = [16, 16], strides = [1, 1]} : vector<16x96xf32> to vector<16x16xf32>
    %274 = arith.truncf %273 : vector<16x16xf32> to vector<16x16xbf16>
    %275 = vector.extract_strided_slice %245 {offsets = [0, 48], sizes = [16, 16], strides = [1, 1]} : vector<16x96xf32> to vector<16x16xf32>
    %276 = arith.truncf %275 : vector<16x16xf32> to vector<16x16xbf16>
    %277 = vector.extract_strided_slice %245 {offsets = [0, 80], sizes = [16, 16], strides = [1, 1]} : vector<16x96xf32> to vector<16x16xf32>
    %278 = arith.truncf %277 : vector<16x16xf32> to vector<16x16xbf16>
    %cst_142 = arith.constant dense<0.000000e+00> : vector<16x16xf32>
    %279 = tpu.matmul %274, %276, %cst_142 {dimension_numbers = #tpu.dot_dimension_numbers<[1], [1], [0], [0], [0, 0, 1, 0], [], []>} : vector<16x16xbf16>, vector<16x16xbf16>, vector<16x16xf32> -> vector<16x16xf32>
    %280 = arith.addf %279, %65 : vector<16x16xf32>
    %cst_143 = arith.constant dense<0xFF800000> : vector<16xf32>
    %281 = vector.multi_reduction <maximumf>, %280, %cst_143 [1] : vector<16x16xf32> to vector<16xf32>
    %282 = vector.shape_cast %281 : vector<16xf32> to vector<16x1xf32>
    %283 = vector.broadcast %282 : vector<16x1xf32> to vector<16x16xf32>
    %284 = arith.subf %280, %283 : vector<16x16xf32>
    %285 = math.exp %284 : vector<16x16xf32>
    %cst_144 = arith.constant dense<0.000000e+00> : vector<16xf32>
    %286 = vector.multi_reduction <add>, %285, %cst_144 [1] : vector<16x16xf32> to vector<16xf32>
    %287 = vector.shape_cast %286 : vector<16xf32> to vector<16x1xf32>
    %288 = tpu.reciprocal %287 {approx = true} : vector<16x1xf32> -> vector<16x1xf32>
    %289 = vector.broadcast %288 : vector<16x1xf32> to vector<16x16xf32>
    %290 = arith.mulf %285, %289 : vector<16x16xf32>
    %291 = arith.truncf %290 : vector<16x16xf32> to vector<16x16xbf16>
    %cst_145 = arith.constant dense<0.000000e+00> : vector<16x16xf32>
    %292 = tpu.matmul %291, %278, %cst_145 {dimension_numbers = #tpu.dot_dimension_numbers<[1], [0], [0], [1], [0, 0, 1, 1], [], []>} : vector<16x16xbf16>, vector<16x16xbf16>, vector<16x16xf32> -> vector<16x16xf32>
    %293 = arith.truncf %292 : vector<16x16xf32> to vector<16x16xbf16>
    %294 = vector.extract_strided_slice %247 {offsets = [16, 0], sizes = [16, 32], strides = [1, 1]} : vector<32x32xbf16> to vector<16x32xbf16>
    %cst_146 = arith.constant dense<0.000000e+00> : vector<16x32xf32>
    %295 = tpu.matmul %293, %294, %cst_146 {dimension_numbers = #tpu.dot_dimension_numbers<[1], [0], [0], [1], [0, 0, 1, 1], [], []>} : vector<16x16xbf16>, vector<16x32xbf16>, vector<16x32xf32> -> vector<16x32xf32>
    %296 = arith.addf %272, %295 : vector<16x32xf32>
    %297 = arith.addf %211, %296 : vector<16x32xf32>
    %c1_147 = arith.constant 1 : index
    %c0_148 = arith.constant 0 : index
    %c0_149 = arith.constant 0 : index
    %298 = vector.load %arg9[%c1_147, %c0_148, %c0_149] : memref<2x1x32xf32, #tpu.memory_space<vmem>>, vector<1x1x32xf32>
    %299 = vector.shape_cast %298 : vector<1x1x32xf32> to vector<1x32xf32>
    %300 = vector.broadcast %299 : vector<1x32xf32> to vector<16x32xf32>
    %301 = arith.addf %297, %300 : vector<16x32xf32>
    %c1_150 = arith.constant 1 : index
    %c0_151 = arith.constant 0 : index
    %c0_152 = arith.constant 0 : index
    %302 = vector.load %arg10[%c1_150, %c0_151, %c0_152] : memref<2x1x32xf32, #tpu.memory_space<vmem>>, vector<1x1x32xf32>
    %303 = vector.shape_cast %302 : vector<1x1x32xf32> to vector<1x32xf32>
    %c1_153 = arith.constant 1 : index
    %c0_154 = arith.constant 0 : index
    %c0_155 = arith.constant 0 : index
    %304 = vector.load %arg11[%c1_153, %c0_154, %c0_155] : memref<2x1x32xf32, #tpu.memory_space<vmem>>, vector<1x1x32xf32>
    %305 = vector.shape_cast %304 : vector<1x1x32xf32> to vector<1x32xf32>
    %cst_156 = arith.constant dense<0.000000e+00> : vector<16xf32>
    %306 = vector.multi_reduction <add>, %301, %cst_156 [1] : vector<16x32xf32> to vector<16xf32>
    %307 = vector.shape_cast %306 : vector<16xf32> to vector<16x1xf32>
    %cst_157 = arith.constant 3.200000e+01 : f32
    %308 = vector.broadcast %cst_157 : f32 to vector<16x1xf32>
    %309 = arith.divf %307, %308 : vector<16x1xf32>
    %310 = vector.broadcast %309 : vector<16x1xf32> to vector<16x32xf32>
    %311 = arith.subf %301, %310 : vector<16x32xf32>
    %312 = arith.mulf %311, %311 : vector<16x32xf32>
    %cst_158 = arith.constant dense<0.000000e+00> : vector<16xf32>
    %313 = vector.multi_reduction <add>, %312, %cst_158 [1] : vector<16x32xf32> to vector<16xf32>
    %314 = vector.shape_cast %313 : vector<16xf32> to vector<16x1xf32>
    %cst_159 = arith.constant 3.200000e+01 : f32
    %315 = vector.broadcast %cst_159 : f32 to vector<16x1xf32>
    %316 = arith.divf %314, %315 : vector<16x1xf32>
    %317 = vector.broadcast %309 : vector<16x1xf32> to vector<16x32xf32>
    %318 = arith.subf %301, %317 : vector<16x32xf32>
    %cst_160 = arith.constant 9.99999974E-6 : f32
    %319 = vector.broadcast %cst_160 : f32 to vector<16x1xf32>
    %320 = arith.addf %316, %319 : vector<16x1xf32>
    %321 = math.rsqrt %320 : vector<16x1xf32>
    %322 = vector.broadcast %321 : vector<16x1xf32> to vector<16x32xf32>
    %323 = arith.mulf %318, %322 : vector<16x32xf32>
    %324 = vector.broadcast %303 : vector<1x32xf32> to vector<16x32xf32>
    %325 = arith.mulf %323, %324 : vector<16x32xf32>
    %326 = vector.broadcast %305 : vector<1x32xf32> to vector<16x32xf32>
    %327 = arith.addf %325, %326 : vector<16x32xf32>
    %328 = arith.truncf %327 : vector<16x32xf32> to vector<16x32xbf16>
    %c1_161 = arith.constant 1 : index
    %c0_162 = arith.constant 0 : index
    %c0_163 = arith.constant 0 : index
    %329 = vector.load %arg12[%c1_161, %c0_162, %c0_163] : memref<2x32x128xbf16, #tpu.memory_space<vmem>>, vector<1x32x128xbf16>
    %330 = vector.shape_cast %329 : vector<1x32x128xbf16> to vector<32x128xbf16>
    %cst_164 = arith.constant dense<0.000000e+00> : vector<16x128xf32>
    %331 = tpu.matmul %328, %330, %cst_164 {dimension_numbers = #tpu.dot_dimension_numbers<[1], [0], [0], [1], [0, 0, 1, 1], [], []>} : vector<16x32xbf16>, vector<32x128xbf16>, vector<16x128xf32> -> vector<16x128xf32>
    %c1_165 = arith.constant 1 : index
    %c0_166 = arith.constant 0 : index
    %c0_167 = arith.constant 0 : index
    %332 = vector.load %arg13[%c1_165, %c0_166, %c0_167] : memref<2x1x128xf32, #tpu.memory_space<vmem>>, vector<1x1x128xf32>
    %333 = vector.shape_cast %332 : vector<1x1x128xf32> to vector<1x128xf32>
    %334 = vector.broadcast %333 : vector<1x128xf32> to vector<16x128xf32>
    %335 = arith.addf %331, %334 : vector<16x128xf32>
    %336 = arith.mulf %335, %335 : vector<16x128xf32>
    %337 = arith.mulf %335, %336 : vector<16x128xf32>
    %cst_168 = arith.constant 4.471500e-02 : f32
    %338 = vector.broadcast %cst_168 : f32 to vector<16x128xf32>
    %339 = arith.mulf %338, %337 : vector<16x128xf32>
    %340 = arith.addf %335, %339 : vector<16x128xf32>
    %cst_169 = arith.constant 0.797884583 : f32
    %341 = vector.broadcast %cst_169 : f32 to vector<16x128xf32>
    %342 = arith.mulf %341, %340 : vector<16x128xf32>
    %343 = math.tanh %342 : vector<16x128xf32>
    %cst_170 = arith.constant 1.000000e+00 : f32
    %344 = vector.broadcast %cst_170 : f32 to vector<16x128xf32>
    %345 = arith.addf %344, %343 : vector<16x128xf32>
    %cst_171 = arith.constant 5.000000e-01 : f32
    %346 = vector.broadcast %cst_171 : f32 to vector<16x128xf32>
    %347 = arith.mulf %346, %345 : vector<16x128xf32>
    %348 = arith.mulf %335, %347 : vector<16x128xf32>
    %349 = arith.truncf %348 : vector<16x128xf32> to vector<16x128xbf16>
    %c1_172 = arith.constant 1 : index
    %c0_173 = arith.constant 0 : index
    %c0_174 = arith.constant 0 : index
    %350 = vector.load %arg14[%c1_172, %c0_173, %c0_174] : memref<2x128x32xbf16, #tpu.memory_space<vmem>>, vector<1x128x32xbf16>
    %351 = vector.shape_cast %350 : vector<1x128x32xbf16> to vector<128x32xbf16>
    %cst_175 = arith.constant dense<0.000000e+00> : vector<16x32xf32>
    %352 = tpu.matmul %349, %351, %cst_175 {dimension_numbers = #tpu.dot_dimension_numbers<[1], [0], [0], [1], [0, 0, 1, 1], [], []>} : vector<16x128xbf16>, vector<128x32xbf16>, vector<16x32xf32> -> vector<16x32xf32>
    %c1_176 = arith.constant 1 : index
    %c0_177 = arith.constant 0 : index
    %c0_178 = arith.constant 0 : index
    %353 = vector.load %arg15[%c1_176, %c0_177, %c0_178] : memref<2x1x32xf32, #tpu.memory_space<vmem>>, vector<1x1x32xf32>
    %354 = vector.shape_cast %353 : vector<1x1x32xf32> to vector<1x32xf32>
    %355 = vector.broadcast %354 : vector<1x32xf32> to vector<16x32xf32>
    %356 = arith.addf %352, %355 : vector<16x32xf32>
    %357 = arith.addf %301, %356 : vector<16x32xf32>
    %358 = arith.truncf %357 : vector<16x32xf32> to vector<16x32xbf16>
    %c0_179 = arith.constant 0 : index
    %c0_180 = arith.constant 0 : index
    %359 = vector.load %arg16[%c0_179, %c0_180] : memref<32x128xbf16, #tpu.memory_space<vmem>>, vector<32x128xbf16>
    %cst_181 = arith.constant dense<0.000000e+00> : vector<16x128xf32>
    %360 = tpu.matmul %358, %359, %cst_181 {dimension_numbers = #tpu.dot_dimension_numbers<[1], [0], [0], [1], [0, 0, 1, 1], [], []>} : vector<16x32xbf16>, vector<32x128xbf16>, vector<16x128xf32> -> vector<16x128xf32>
    %c0_182 = arith.constant 0 : index
    %c0_183 = arith.constant 0 : index
    %361 = vector.load %arg17[%c0_182, %c0_183] : memref<1x128xf32, #tpu.memory_space<vmem>>, vector<1x128xf32>
    %362 = vector.broadcast %361 : vector<1x128xf32> to vector<16x128xf32>
    %363 = arith.addf %360, %362 : vector<16x128xf32>
    %c0_184 = arith.constant 0 : index
    %c0_185 = arith.constant 0 : index
    %364 = vector.load %arg18[%c0_184, %c0_185] : memref<16x128xf32, #tpu.memory_space<vmem>>, vector<16x128xf32>
    tpu.vector_store %arg18[%c0_184, %c0_185], %363 {strides = array<i32>} : memref<16x128xf32, #tpu.memory_space<vmem>>, vector<16x128xf32>,
    return
  }
  func.func @transform_0(%arg0: i32, %arg1: memref<16xi32, #tpu.memory_space<smem>>) -> (i32, i32) {
    %c0_i32 = arith.constant 0 : i32
    %c0_i32_0 = arith.constant 0 : i32
    %c0_i32_1 = arith.constant 0 : i32
    return %c0_i32, %c0_i32_0 : i32, i32
  }
  func.func @transform_1(%arg0: i32, %arg1: memref<16xi32, #tpu.memory_space<smem>>) -> (i32, i32) {
    %c0_i32 = arith.constant 0 : i32
    %c0_i32_0 = arith.constant 0 : i32
    %c0_i32_1 = arith.constant 0 : i32
    return %c0_i32, %c0_i32_0 : i32, i32
  }
  func.func @transform_2(%arg0: i32, %arg1: memref<16xi32, #tpu.memory_space<smem>>) -> (i32, i32, i32) {
    %c0_i32 = arith.constant 0 : i32
    %c0_i32_0 = arith.constant 0 : i32
    %c0_i32_1 = arith.constant 0 : i32
    %c0_i32_2 = arith.constant 0 : i32
    return %c0_i32, %c0_i32_0, %c0_i32_1 : i32, i32, i32
  }
  func.func @transform_3(%arg0: i32, %arg1: memref<16xi32, #tpu.memory_space<smem>>) -> (i32, i32, i32) {
    %c0_i32 = arith.constant 0 : i32
    %c0_i32_0 = arith.constant 0 : i32
    %c0_i32_1 = arith.constant 0 : i32
    %c0_i32_2 = arith.constant 0 : i32
    return %c0_i32, %c0_i32_0, %c0_i32_1 : i32, i32, i32
  }
  func.func @transform_4(%arg0: i32, %arg1: memref<16xi32, #tpu.memory_space<smem>>) -> (i32, i32, i32) {
    %c0_i32 = arith.constant 0 : i32
    %c0_i32_0 = arith.constant 0 : i32
    %c0_i32_1 = arith.constant 0 : i32
    %c0_i32_2 = arith.constant 0 : i32
    return %c0_i32, %c0_i32_0, %c0_i32_1 : i32, i32, i32
  }
  func.func @transform_5(%arg0: i32, %arg1: memref<16xi32, #tpu.memory_space<smem>>) -> (i32, i32, i32) {
    %c0_i32 = arith.constant 0 : i32
    %c0_i32_0 = arith.constant 0 : i32
    %c0_i32_1 = arith.constant 0 : i32
    %c0_i32_2 = arith.constant 0 : i32
    return %c0_i32, %c0_i32_0, %c0_i32_1 : i32, i32, i32
  }
  func.func @transform_6(%arg0: i32, %arg1: memref<16xi32, #tpu.memory_space<smem>>) -> (i32, i32, i32) {
    %c0_i32 = arith.constant 0 : i32
    %c0_i32_0 = arith.constant 0 : i32
    %c0_i32_1 = arith.constant 0 : i32
    %c0_i32_2 = arith.constant 0 : i32
    return %c0_i32, %c0_i32_0, %c0_i32_1 : i32, i32, i32
  }
  func.func @transform_7(%arg0: i32, %arg1: memref<16xi32, #tpu.memory_space<smem>>) -> (i32, i32, i32) {
    %c0_i32 = arith.constant 0 : i32
    %c0_i32_0 = arith.constant 0 : i32
    %c0_i32_1 = arith.constant 0 : i32
    %c0_i32_2 = arith.constant 0 : i32
    return %c0_i32, %c0_i32_0, %c0_i32_1 : i32, i32, i32
  }
  func.func @transform_8(%arg0: i32, %arg1: memref<16xi32, #tpu.memory_space<smem>>) -> (i32, i32, i32) {
    %c0_i32 = arith.constant 0 : i32
    %c0_i32_0 = arith.constant 0 : i32
    %c0_i32_1 = arith.constant 0 : i32
    %c0_i32_2 = arith.constant 0 : i32
    return %c0_i32, %c0_i32_0, %c0_i32_1 : i32, i32, i32
  }
  func.func @transform_9(%arg0: i32, %arg1: memref<16xi32, #tpu.memory_space<smem>>) -> (i32, i32, i32) {
    %c0_i32 = arith.constant 0 : i32
    %c0_i32_0 = arith.constant 0 : i32
    %c0_i32_1 = arith.constant 0 : i32
    %c0_i32_2 = arith.constant 0 : i32
    return %c0_i32, %c0_i32_0, %c0_i32_1 : i32, i32, i32
  }
  func.func @transform_10(%arg0: i32, %arg1: memref<16xi32, #tpu.memory_space<smem>>) -> (i32, i32, i32) {
    %c0_i32 = arith.constant 0 : i32
    %c0_i32_0 = arith.constant 0 : i32
    %c0_i32_1 = arith.constant 0 : i32
    %c0_i32_2 = arith.constant 0 : i32
    return %c0_i32, %c0_i32_0, %c0_i32_1 : i32, i32, i32
  }
  func.func @transform_11(%arg0: i32, %arg1: memref<16xi32, #tpu.memory_space<smem>>) -> (i32, i32, i32) {
    %c0_i32 = arith.constant 0 : i32
    %c0_i32_0 = arith.constant 0 : i32
    %c0_i32_1 = arith.constant 0 : i32
    %c0_i32_2 = arith.constant 0 : i32
    return %c0_i32, %c0_i32_0, %c0_i32_1 : i32, i32, i32
  }
  func.func @transform_12(%arg0: i32, %arg1: memref<16xi32, #tpu.memory_space<smem>>) -> (i32, i32, i32) {
    %c0_i32 = arith.constant 0 : i32
    %c0_i32_0 = arith.constant 0 : i32
    %c0_i32_1 = arith.constant 0 : i32
    %c0_i32_2 = arith.constant 0 : i32
    return %c0_i32, %c0_i32_0, %c0_i32_1 : i32, i32, i32
  }
  func.func @transform_13(%arg0: i32, %arg1: memref<16xi32, #tpu.memory_space<smem>>) -> (i32, i32, i32) {
    %c0_i32 = arith.constant 0 : i32
    %c0_i32_0 = arith.constant 0 : i32
    %c0_i32_1 = arith.constant 0 : i32
    %c0_i32_2 = arith.constant 0 : i32
    return %c0_i32, %c0_i32_0, %c0_i32_1 : i32, i32, i32
  }
  func.func @transform_14(%arg0: i32, %arg1: memref<16xi32, #tpu.memory_space<smem>>) -> (i32, i32) {
    %c0_i32 = arith.constant 0 : i32
    %c0_i32_0 = arith.constant 0 : i32
    %c0_i32_1 = arith.constant 0 : i32
    return %c0_i32, %c0_i32_0 : i32, i32
  }
  func.func @transform_15(%arg0: i32, %arg1: memref<16xi32, #tpu.memory_space<smem>>) -> (i32, i32) {
    %c0_i32 = arith.constant 0 : i32
    %c0_i32_0 = arith.constant 0 : i32
    %c0_i32_1 = arith.constant 0 : i32
    return %c0_i32, %c0_i32_0 : i32, i32
  }
  func.func @transform_16(%arg0: i32, %arg1: memref<16xi32, #tpu.memory_space<smem>>) -> (i32, i32) {
    %c0_i32 = arith.constant 0 : i32
    %c0_i32_0 = arith.constant 0 : i32
    %c0_i32_1 = arith.constant 0 : i32
    return %c0_i32, %c0_i32_0 : i32, i32
  }
}

</mosaic_0001>

<llo_original>
// kernel: tpu_custom_call.1
$region0: #{tpu_custom_call.1}
  #allocation0 [shape = 'u32[]', space=smem, size = 0x4, offset = 0x4, fixed_abs, tag = 'smem constant byte address 0x4 - core index']
  #allocation1 [shape = 'u32[72,128]{1,0:T(1,128)}', space=vmem, size = 0x9000, scoped, tag = 'internal scratch']
  #allocation2 [shape = 'f32[16,32]{1,0:T(8,128)}', space=vmem, size = 0x2000, scoped, tag = 'scratch operand']
  #allocation3 [shape = 's32[1]{0}', space=sflag, size = 0x4, scoped, tag = 'scoped memory for tpu_custom_call.1']
  #allocation4 [shape = 'u8[512]{0}', space=smem, size = 0x200, scoped, tag = 'prefetched SMEM operand 0']
  %s0 = inlined_call_operand.vmem [shape: s32[16], index: 0, kind: input, shape index: {}]
  %s1 = inlined_call_operand.vmem [shape: f32[64,32], index: 1, kind: input, shape index: {}]
  %s2 = inlined_call_operand.vmem [shape: f32[16,16], index: 2, kind: input, shape index: {}]
  %s3 = inlined_call_operand.vmem [shape: f32[2,1,32], index: 3, kind: input, shape index: {}]
  %s4 = inlined_call_operand.vmem [shape: f32[2,1,32], index: 4, kind: input, shape index: {}]
  %s5 = inlined_call_operand.vmem [shape: bf16[2,32,96], index: 5, kind: input, shape index: {}]
  %s6 = inlined_call_operand.vmem [shape: f32[2,1,96], index: 6, kind: input, shape index: {}]
  %s7 = inlined_call_operand.vmem [shape: bf16[2,32,32], index: 7, kind: input, shape index: {}]
  %s8 = inlined_call_operand.vmem [shape: f32[2,1,32], index: 8, kind: input, shape index: {}]
  %s9 = inlined_call_operand.vmem [shape: f32[2,1,32], index: 9, kind: input, shape index: {}]
  %s10 = inlined_call_operand.vmem [shape: f32[2,1,32], index: 10, kind: input, shape index: {}]
  %s11 = inlined_call_operand.vmem [shape: bf16[2,32,128], index: 11, kind: input, shape index: {}]
  %s12 = inlined_call_operand.vmem [shape: f32[2,1,128], index: 12, kind: input, shape index: {}]
  %s13 = inlined_call_operand.vmem [shape: bf16[2,128,32], index: 13, kind: input, shape index: {}]
  %s14 = inlined_call_operand.vmem [shape: f32[2,1,32], index: 14, kind: input, shape index: {}]
  %s15 = inlined_call_operand.vmem [shape: bf16[32,128], index: 15, kind: input, shape index: {}]
  %s16 = inlined_call_operand.vmem [shape: f32[1,128], index: 16, kind: input, shape index: {}]
  %s17 = inlined_call_operand.hbm [shape: f32[16,128], index: 17, kind: output, shape index: {}]
  %s18 = sld [smem:[#allocation0]]
  $region74: #{tpu_custom_call.1} parent=0
    _
  %s20 = ssub.s32 1, %s18
  %s21 = scalar_select 0, %s20, %s18
  %s23 = sshll.u32 %s0, 4
  %s24 = int_to_ptr.vmem [resolvable:$true] %s23
  %26 = dma.vmem_to_smem %s24, 16, [#allocation4], [#allocation3]
  %28 = dma.done [#allocation3], 16
  %29 = sfence
  $region1: #{tpu_custom_call.1} parent=0
    #allocation5 [shape = 'u8[8192]{0}', space=vmem, size = 0x2000, scoped, tag = 'output window, operand 0, single buffered']
    #allocation6 [shape = 's32[1]{0}', space=sflag, size = 0x4, scoped, tag = 'scoped memory for tpu_custom_call.1']
    %30 = vsyncpa [#allocation6], 0
    // Predicated region
    $region2: #{tpu_custom_call.1} parent=1 // pred_check
      _
    $region3: #{tpu_custom_call.1} parent=1 // pred_check_branch
      %32 = sbr.rel (0) target = $region5
    $region4: #{tpu_custom_call.1} parent=1 // pred_region
      _
    $region5: #{tpu_custom_call.1} parent=1 // pred_fallthru
      _
    // Predicated region
    $region6: #{tpu_custom_call.1} parent=1 // pred_check
      _
    $region7: #{tpu_custom_call.1} parent=1 // pred_check_branch
      %34 = sbr.rel (0) target = $region9
    $region8: #{tpu_custom_call.1} parent=1 // pred_region
      _
    $region9: #{tpu_custom_call.1} parent=1 // pred_fallthru
      _
    // Predicated region
    $region10: #{tpu_custom_call.1} parent=1 // pred_check
      _
    $region11: #{tpu_custom_call.1} parent=1 // pred_check_branch
      %36 = sbr.rel (0) target = $region13
    $region12: #{tpu_custom_call.1} parent=1 // pred_region
      _
    $region13: #{tpu_custom_call.1} parent=1 // pred_fallthru
      _
    // Predicated region
    $region14: #{tpu_custom_call.1} parent=1 // pred_check
      _
    $region15: #{tpu_custom_call.1} parent=1 // pred_check_branch
      %38 = sbr.rel (0) target = $region17
    $region16: #{tpu_custom_call.1} parent=1 // pred_region
      _
    $region17: #{tpu_custom_call.1} parent=1 // pred_fallthru
      _
    // Predicated region
    $region18: #{tpu_custom_call.1} parent=1 // pred_check
      _
    $region19: #{tpu_custom_call.1} parent=1 // pred_check_branch
      %40 = sbr.rel (0) target = $region21
    $region20: #{tpu_custom_call.1} parent=1 // pred_region
      _
    $region21: #{tpu_custom_call.1} parent=1 // pred_fallthru
      _
    // Predicated region
    $region22: #{tpu_custom_call.1} parent=1 // pred_check
      _
    $region23: #{tpu_custom_call.1} parent=1 // pred_check_branch
      %42 = sbr.rel (0) target = $region25
    $region24: #{tpu_custom_call.1} parent=1 // pred_region
      _
    $region25: #{tpu_custom_call.1} parent=1 // pred_fallthru
      _
    // Predicated region
    $region26: #{tpu_custom_call.1} parent=1 // pred_check
      _
    $region27: #{tpu_custom_call.1} parent=1 // pred_check_branch
      %44 = sbr.rel (0) target = $region29
    $region28: #{tpu_custom_call.1} parent=1 // pred_region
      _
    $region29: #{tpu_custom_call.1} parent=1 // pred_fallthru
      _
    // Predicated region
    $region30: #{tpu_custom_call.1} parent=1 // pred_check
      _
    $region31: #{tpu_custom_call.1} parent=1 // pred_check_branch
      %46 = sbr.rel (0) target = $region33
    $region32: #{tpu_custom_call.1} parent=1 // pred_region
      _
    $region33: #{tpu_custom_call.1} parent=1 // pred_fallthru
      _
    // Predicated region
    $region34: #{tpu_custom_call.1} parent=1 // pred_check
      _
    $region35: #{tpu_custom_call.1} parent=1 // pred_check_branch
      %48 = sbr.rel (0) target = $region37
    $region36: #{tpu_custom_call.1} parent=1 // pred_region
      _
    $region37: #{tpu_custom_call.1} parent=1 // pred_fallthru
      _
    // Predicated region
    $region38: #{tpu_custom_call.1} parent=1 // pred_check
      _
    $region39: #{tpu_custom_call.1} parent=1 // pred_check_branch
      %50 = sbr.rel (0) target = $region41
    $region40: #{tpu_custom_call.1} parent=1 // pred_region
      _
    $region41: #{tpu_custom_call.1} parent=1 // pred_fallthru
      _
    // Predicated region
    $region42: #{tpu_custom_call.1} parent=1 // pred_check
      _
    $region43: #{tpu_custom_call.1} parent=1 // pred_check_branch
      %52 = sbr.rel (0) target = $region45
    $region44: #{tpu_custom_call.1} parent=1 // pred_region
      _
    $region45: #{tpu_custom_call.1} parent=1 // pred_fallthru
      _
    // Predicated region
    $region46: #{tpu_custom_call.1} parent=1 // pred_check
      _
    $region47: #{tpu_custom_call.1} parent=1 // pred_check_branch
      %54 = sbr.rel (0) target = $region49
    $region48: #{tpu_custom_call.1} parent=1 // pred_region
      _
    $region49: #{tpu_custom_call.1} parent=1 // pred_fallthru
      _
    // Predicated region
    $region50: #{tpu_custom_call.1} parent=1 // pred_check
      _
    $region51: #{tpu_custom_call.1} parent=1 // pred_check_branch
      %56 = sbr.rel (0) target = $region53
    $region52: #{tpu_custom_call.1} parent=1 // pred_region
      _
    $region53: #{tpu_custom_call.1} parent=1 // pred_fallthru
      _
    // Predicated region
    $region54: #{tpu_custom_call.1} parent=1 // pred_check
      _
    $region55: #{tpu_custom_call.1} parent=1 // pred_check_branch
      %58 = sbr.rel (0) target = $region57
    $region56: #{tpu_custom_call.1} parent=1 // pred_region
      _
    $region57: #{tpu_custom_call.1} parent=1 // pred_fallthru
      _
    // Predicated region
    $region58: #{tpu_custom_call.1} parent=1 // pred_check
      _
    $region59: #{tpu_custom_call.1} parent=1 // pred_check_branch
      %60 = sbr.rel (0) target = $region61
    $region60: #{tpu_custom_call.1} parent=1 // pred_region
      _
    $region61: #{tpu_custom_call.1} parent=1 // pred_fallthru
      _
    // Predicated region
    $region62: #{tpu_custom_call.1} parent=1 // pred_check
      _
    $region63: #{tpu_custom_call.1} parent=1 // pred_check_branch
      %62 = sbr.rel (0) target = $region65
    $region64: #{tpu_custom_call.1} parent=1 // pred_region
      _
    $region65: #{tpu_custom_call.1} parent=1 // pred_fallthru
      _
    %s64 = sld [smem:[#allocation4]]
    %s65 = scalar_lea.vmem %s1, %s64
    %v66 = vld [vmem:[%s65] sm:$0x1]
    %vm67 = vcmask 253952
    %68 = vst.msk [vmem:[#allocation2] sm:$0x1] %vm67, %v66
    %s69 = sld [smem:[#allocation4 + $0x1]]
    %s70 = scalar_lea.vmem %s1, %s69
    %v71 = vld [vmem:[%s70] sm:$0x1]
    %72 = vst.msk [vmem:[#allocation2 + $0x1] sm:$0x1] %vm67, %v71
    %s73 = sld [smem:[#allocation4 + $0x2]]
    %s74 = scalar_lea.vmem %s1, %s73
    %v75 = vld [vmem:[%s74] sm:$0x1]
    %76 = vst.msk [vmem:[#allocation2 + $0x2] sm:$0x1] %vm67, %v75
    %s77 = sld [smem:[#allocation4 + $0x3]]
    %s78 = scalar_lea.vmem %s1, %s77
    %v79 = vld [vmem:[%s78] sm:$0x1]
    %80 = vst.msk [vmem:[#allocation2 + $0x3] sm:$0x1] %vm67, %v79
    %s81 = sld [smem:[#allocation4 + $0x4]]
    %s82 = scalar_lea.vmem %s1, %s81
    %v83 = vld [vmem:[%s82] sm:$0x1]
    %84 = vst.msk [vmem:[#allocation2 + $0x4] sm:$0x1] %vm67, %v83
    %s85 = sld [smem:[#allocation4 + $0x5]]
    %s86 = scalar_lea.vmem %s1, %s85
    %v87 = vld [vmem:[%s86] sm:$0x1]
    %88 = vst.msk [vmem:[#allocation2 + $0x5] sm:$0x1] %vm67, %v87
    %s89 = sld [smem:[#allocation4 + $0x6]]
    %s90 = scalar_lea.vmem %s1, %s89
    %v91 = vld [vmem:[%s90] sm:$0x1]
    %92 = vst.msk [vmem:[#allocation2 + $0x6] sm:$0x1] %vm67, %v91
    %s93 = sld [smem:[#allocation4 + $0x7]]
    %s94 = scalar_lea.vmem %s1, %s93
    %v95 = vld [vmem:[%s94] sm:$0x1]
    %96 = vst.msk [vmem:[#allocation2 + $0x7] sm:$0x1] %vm67, %v95
    %s97 = sld [smem:[#allocation4 + $0x8]]
    %s98 = scalar_lea.vmem %s1, %s97
    %v99 = vld [vmem:[%s98] sm:$0x1]
    %100 = vst.msk [vmem:[#allocation2 + $0x8] sm:$0x1] %vm67, %v99
    %s101 = sld [smem:[#allocation4 + $0x9]]
    %s102 = scalar_lea.vmem %s1, %s101
    %v103 = vld [vmem:[%s102] sm:$0x1]
    %104 = vst.msk [vmem:[#allocation2 + $0x9] sm:$0x1] %vm67, %v103
    %s105 = sld [smem:[#allocation4 + $0xa]]
    %s106 = scalar_lea.vmem %s1, %s105
    %v107 = vld [vmem:[%s106] sm:$0x1]
    %108 = vst.msk [vmem:[#allocation2 + $0xa] sm:$0x1] %vm67, %v107
    %s109 = sld [smem:[#allocation4 + $0xb]]
    %s110 = scalar_lea.vmem %s1, %s109
    %v111 = vld [vmem:[%s110] sm:$0x1]
    %112 = vst.msk [vmem:[#allocation2 + $0xb] sm:$0x1] %vm67, %v111
    %s113 = sld [smem:[#allocation4 + $0xc]]
    %s114 = scalar_lea.vmem %s1, %s113
    %v115 = vld [vmem:[%s114] sm:$0x1]
    %116 = vst.msk [vmem:[#allocation2 + $0xc] sm:$0x1] %vm67, %v115
    %s117 = sld [smem:[#allocation4 + $0xd]]
    %s118 = scalar_lea.vmem %s1, %s117
    %v119 = vld [vmem:[%s118] sm:$0x1]
    %120 = vst.msk [vmem:[#allocation2 + $0xd] sm:$0x1] %vm67, %v119
    %s121 = sld [smem:[#allocation4 + $0xe]]
    %s122 = scalar_lea.vmem %s1, %s121
    %v123 = vld [vmem:[%s122] sm:$0x1]
    %124 = vst.msk [vmem:[#allocation2 + $0xe] sm:$0x1] %vm67, %v123
    %s125 = sld [smem:[#allocation4 + $0xf]]
    %s126 = scalar_lea.vmem %s1, %s125
    %v127 = vld [vmem:[%s126] sm:$0x1]
    %128 = vst.msk [vmem:[#allocation2 + $0xf] sm:$0x1] %vm67, %v127
    %v129 = vld [vmem:[#allocation2] sm:$0xff]
    %v130 = vld [vmem:[#allocation2 + $0x8] sm:$0xff]
    %v131 = vld [vmem:[%s2] sm:$0xff]
    %v132 = vld [vmem:[%s2 + $0x8] sm:$0xff]
    %v133 = vld [vmem:[%s3] sm:$0x1]
    %v134 = vld [vmem:[%s4] sm:$0x1]
    %vm135 = vcmask 261120
    %v136 = vsel %vm135, %v129, 0.0
    %137 = vadd.xlane.f32.xlu0 %v136
    %v138 = vpop.xlane.xlu0 %137
    %v139 = vsel %vm135, %v130, 0.0
    %140 = vadd.xlane.f32.xlu0 %v139
    %v141 = vpop.xlane.xlu0 %140
    %v142 = vrcp.pop 32.0
    %v143 = vmul.f32 32.0, %v142
    %v144 = vsub.f32 1.0, %v143
    %v145 = vmul.f32 %v142, %v144
    %v146 = vadd.f32 %v142, %v145
    %vm147 = vweird.f32 %v142
    %v148 = vsel %vm147, %v142, %v146
    %v149 = vmul.f32 %v138, %v148
    %v150 = vmul.f32 %v141, %v148
    %v151 = vsub.f32 %v129, %v149
    %v152 = vsub.f32 %v130, %v150
    %v153 = vmul.f32 %v151, %v151
    %v154 = vmul.f32 %v152, %v152
    %v155 = vsel %vm135, %v153, 0.0
    %156 = vadd.xlane.f32.xlu0 %v155
    %v157 = vpop.xlane.xlu0 %156
    %v158 = vsel %vm135, %v154, 0.0
    %159 = vadd.xlane.f32.xlu0 %v158
    %v160 = vpop.xlane.xlu0 %159
    %v161 = vmul.f32 %v157, %v148
    %v162 = vmul.f32 %v160, %v148
    %v163 = vadd.f32 %v161, 1e-05
    %v164 = vadd.f32 %v162, 1e-05
    %v165 = vrsqrt.pop %v163
    %v166 = vmul.f32 %v165, %v163
    %v167 = vmul.f32 %v166, %v165
    %v168 = vmul.f32 0.5, %v167
    %v169 = vsub.f32 1.5, %v168
    %v170 = vmul.f32 %v165, %v169
    %vm171 = vweird.f32 %v163
    %vm172 = vweird.f32 %v165
    %vm173 = vmor %vm171, %vm172
    %v174 = vsel %vm173, %v165, %v170
    %v175 = vrsqrt.pop %v164
    %v176 = vmul.f32 %v175, %v164
    %v177 = vmul.f32 %v176, %v175
    %v178 = vmul.f32 0.5, %v177
    %v179 = vsub.f32 1.5, %v178
    %v180 = vmul.f32 %v175, %v179
    %vm181 = vweird.f32 %v164
    %vm182 = vweird.f32 %v175
    %vm183 = vmor %vm181, %vm182
    %v184 = vsel %vm183, %v175, %v180
    %v185 = vmul.f32 %v151, %v174
    %v186 = vmul.f32 %v152, %v184
    %v188 = vperm.slane %v133, 0
    %v190 = vmul.f32 %v185, %v188
    %v191 = vmul.f32 %v186, %v188
    %v193 = vperm.slane %v134, 0
    %v195 = vadd.f32 %v190, %v193
    %v196 = vadd.f32 %v191, %v193
    %v197 = vpack.c.bf16 %v196, %v195
    %v198 = vld [vmem:[%s5] sm:$0xf]
    %v199 = vld [vmem:[%s5 + $0x4] sm:$0xf]
    %v200 = vld [vmem:[%s5 + $0x8] sm:$0xf]
    %v201 = vld [vmem:[%s5 + $0xc] sm:$0xf]
    %v202 = vld [vmem:[%s6] sm:$0x1]
    %v204 = vperm.slane %v202, 0
    %v210 = vunpack.c.l.b16 %v198
    %v211 = vunpack.c.l.b16 %v199
    %v212 = vunpack.c.l.b16 %v200
    %v213 = vunpack.c.l.b16 %v201
    %v214 = vpack.c.b16 %v211, %v210
    %v215 = vpack.c.b16 %v213, %v212
    %v219 = vsel %vm135, %v197, 0
    %221 = vmatpush.bf16.msra.mxu0 0
    %222 = vmatpush.bf16.msra.mxu0 0
    %223 = vmatpush.bf16.msra.mxu0 0
    %224 = vmatpush.bf16.msra.mxu0 0
    %225 = vmatpush.bf16.msra.mxu0 0
    %226 = vmatpush.bf16.msra.mxu0 0
    %227 = vmatpush.bf16.msra.mxu0 %v215
    %228 = vmatpush.bf16.msra.mxu0 %v214
    %229 = vmatmul.bf16.gmra.mxu0 %v219
    %v230 = vpop.f32.mrf.mxu0
    %v231 = vadd.f32 %v204, %v230
    %v232 = vpop.f32.mrf.mxu0
    %v233 = vadd.f32 %v204, %v232
    %234 = vdwg.mxu0
    %v235 = vld [vmem:[%s7] sm:$0xf]
    %v236 = vld [vmem:[%s7 + $0x4] sm:$0xf]
    %v237 = vld [vmem:[%s7 + $0x8] sm:$0xf]
    %v238 = vld [vmem:[%s7 + $0xc] sm:$0xf]
    %v239 = vpack.c.bf16 %v233, %v231
    %241 = vrot.lane.b32.xlu0 %v239, 96
    %v242 = vpop.permute.xlu0 %241
    %vm243 = vcmask 130048
    %v245 = vsel %vm243, %v239, 0
    %v248 = vsel %vm243, %v242, 0
    %250 = vmatpush.bf16.xpose.msra.mxu0 0
    %251 = vmatpush.bf16.xpose.msra.mxu0 0
    %252 = vmatpush.bf16.xpose.msra.mxu0 0
    %253 = vmatpush.bf16.xpose.msra.mxu0 0
    %254 = vmatpush.bf16.xpose.msra.mxu0 0
    %255 = vmatpush.bf16.xpose.msra.mxu0 0
    %256 = vmatpush.bf16.xpose.msra.mxu0 0
    %257 = vmatpush.bf16.xpose.msra.mxu0 %v248
    %258 = vmatmul.bf16.gmra.mxu0 %v245
    %v259 = vpop.f32.mrf.mxu0
    %v260 = vadd.f32 %v131, %v259
    %v261 = vpop.f32.mrf.mxu0
    %v262 = vadd.f32 %v132, %v261
    %263 = vdwg.mxu0
    %v264 = vsel %vm243, %v260, -inf
    %265 = vmax.xlane.f32.xlu0 %v264
    %v266 = vpop.xlane.xlu0 %265
    %v267 = vsel %vm243, %v262, -inf
    %268 = vmax.xlane.f32.xlu0 %v267
    %v269 = vpop.xlane.xlu0 %268
    %v270 = vsub.f32 %v260, %v266
    %v271 = vsub.f32 %v262, %v269
    %v272 = vmul.f32 %v270, 1.442695
    %v273 = vpow.pop %v272
    %v274 = vmul.f32 %v271, 1.442695
    %v275 = vpow.pop %v274
    %v276 = vsel %vm243, %v273, 0.0
    %277 = vadd.xlane.f32.xlu0 %v276
    %v278 = vpop.xlane.xlu0 %277
    %v279 = vsel %vm243, %v275, 0.0
    %280 = vadd.xlane.f32.xlu0 %v279
    %v281 = vpop.xlane.xlu0 %280
    %v282 = vrcp.pop %v278
    %v283 = vrcp.pop %v281
    %v284 = vmul.f32 %v273, %v282
    %v285 = vmul.f32 %v275, %v283
    %v286 = vpack.c.bf16 %v285, %v284
    %287 = vrot.lane.b32.xlu0 %v239, 64
    %v288 = vpop.permute.xlu0 %287
    %v291 = vsel %vm243, %v286, 0
    %293 = vmatpush.bf16.msra.mxu0 0
    %294 = vmatpush.bf16.msra.mxu0 0
    %295 = vmatpush.bf16.msra.mxu0 0
    %296 = vmatpush.bf16.msra.mxu0 0
    %297 = vmatpush.bf16.msra.mxu0 0
    %298 = vmatpush.bf16.msra.mxu0 0
    %299 = vmatpush.bf16.msra.mxu0 0
    %300 = vmatpush.bf16.msra.mxu0 %v288
    %301 = vmatmul.bf16.gmra.mxu0 %v291
    %v302 = vpop.f32.mrf.mxu0
    %v303 = vadd.f32 0.0, %v302
    %v304 = vpop.f32.mrf.mxu0
    %v305 = vadd.f32 0.0, %v304
    %306 = vdwg.mxu0
    %v307 = vpack.c.bf16 %v305, %v303
    %308 = vrot.lane.b32.xlu0 %v239, 112
    %v309 = vpop.permute.xlu0 %308
    %310 = vrot.lane.b32.xlu0 %v239, 80
    %v311 = vpop.permute.xlu0 %310
    %v313 = vsel %vm243, %v309, 0
    %v316 = vsel %vm243, %v311, 0
    %318 = vmatpush.bf16.xpose.msra.mxu0 0
    %319 = vmatpush.bf16.xpose.msra.mxu0 0
    %320 = vmatpush.bf16.xpose.msra.mxu0 0
    %321 = vmatpush.bf16.xpose.msra.mxu0 0
    %322 = vmatpush.bf16.xpose.msra.mxu0 0
    %323 = vmatpush.bf16.xpose.msra.mxu0 0
    %324 = vmatpush.bf16.xpose.msra.mxu0 0
    %325 = vmatpush.bf16.xpose.msra.mxu0 %v316
    %326 = vmatmul.bf16.gmra.mxu0 %v313
    %v327 = vpop.f32.mrf.mxu0
    %v328 = vadd.f32 %v131, %v327
    %v329 = vpop.f32.mrf.mxu0
    %v330 = vadd.f32 %v132, %v329
    %331 = vdwg.mxu0
    %v332 = vsel %vm243, %v328, -inf
    %333 = vmax.xlane.f32.xlu0 %v332
    %v334 = vpop.xlane.xlu0 %333
    %v335 = vsel %vm243, %v330, -inf
    %336 = vmax.xlane.f32.xlu0 %v335
    %v337 = vpop.xlane.xlu0 %336
    %v338 = vsub.f32 %v328, %v334
    %v339 = vsub.f32 %v330, %v337
    %v340 = vmul.f32 %v338, 1.442695
    %v341 = vpow.pop %v340
    %v342 = vmul.f32 %v339, 1.442695
    %v343 = vpow.pop %v342
    %v344 = vsel %vm243, %v341, 0.0
    %345 = vadd.xlane.f32.xlu0 %v344
    %v346 = vpop.xlane.xlu0 %345
    %v347 = vsel %vm243, %v343, 0.0
    %348 = vadd.xlane.f32.xlu0 %v347
    %v349 = vpop.xlane.xlu0 %348
    %v350 = vrcp.pop %v346
    %v351 = vrcp.pop %v349
    %v352 = vmul.f32 %v341, %v350
    %v353 = vmul.f32 %v343, %v351
    %v354 = vpack.c.bf16 %v353, %v352
    %355 = vrot.lane.b32.xlu0 %v239, 48
    %v356 = vpop.permute.xlu0 %355
    %v359 = vsel %vm243, %v354, 0
    %361 = vmatpush.bf16.msra.mxu0 0
    %362 = vmatpush.bf16.msra.mxu0 0
    %363 = vmatpush.bf16.msra.mxu0 0
    %364 = vmatpush.bf16.msra.mxu0 0
    %365 = vmatpush.bf16.msra.mxu0 0
    %366 = vmatpush.bf16.msra.mxu0 0
    %367 = vmatpush.bf16.msra.mxu0 0
    %368 = vmatpush.bf16.msra.mxu0 %v356
    %369 = vmatmul.bf16.gmra.mxu0 %v359
    %v370 = vpop.f32.mrf.mxu0
    %v371 = vadd.f32 0.0, %v370
    %v372 = vpop.f32.mrf.mxu0
    %v373 = vadd.f32 0.0, %v372
    %374 = vdwg.mxu0
    %v375 = vpack.c.bf16 %v373, %v371
    %v378 = vunpack.c.l.b16 %v237
    %v379 = vunpack.c.l.b16 %v238
    %v380 = vpack.c.b16 %v379, %v378
    %v383 = vsel %vm243, %v375, 0
    %385 = vmatpush.bf16.msra.mxu0 0
    %386 = vmatpush.bf16.msra.mxu0 0
    %387 = vmatpush.bf16.msra.mxu0 0
    %388 = vmatpush.bf16.msra.mxu0 0
    %389 = vmatpush.bf16.msra.mxu0 0
    %390 = vmatpush.bf16.msra.mxu0 0
    %391 = vmatpush.bf16.msra.mxu0 0
    %392 = vmatpush.bf16.msra.mxu0 %v380
    %393 = vmatmul.bf16.gmra.mxu0 %v383
    %v394 = vpop.f32.mrf.mxu0
    %v395 = vadd.f32 0.0, %v394
    %v396 = vpop.f32.mrf.mxu0
    %v397 = vadd.f32 0.0, %v396
    %398 = vdwg.mxu0
    %v401 = vunpack.c.l.b16 %v235
    %v402 = vunpack.c.l.b16 %v236
    %v403 = vpack.c.b16 %v402, %v401
    %v406 = vsel %vm243, %v307, 0
    %408 = vmatpush.bf16.msra.mxu0 0
    %409 = vmatpush.bf16.msra.mxu0 0
    %410 = vmatpush.bf16.msra.mxu0 0
    %411 = vmatpush.bf16.msra.mxu0 0
    %412 = vmatpush.bf16.msra.mxu0 0
    %413 = vmatpush.bf16.msra.mxu0 0
    %414 = vmatpush.bf16.msra.mxu0 0
    %415 = vmatpush.bf16.msra.mxu0 %v403
    %416 = vmatmul.bf16.gmra.mxu0 %v406
    %v417 = vpop.f32.mrf.mxu0
    %v418 = vadd.f32 %v395, %v417
    %v419 = vpop.f32.mrf.mxu0
    %v420 = vadd.f32 %v397, %v419
    %421 = vdwg.mxu0
    %v422 = vadd.f32 %v129, %v418
    %v423 = vadd.f32 %v130, %v420
    %v424 = vld [vmem:[%s8] sm:$0x1]
    %v426 = vperm.slane %v424, 0
    %v428 = vadd.f32 %v422, %v426
    %v429 = vadd.f32 %v423, %v426
    %v430 = vld [vmem:[%s9] sm:$0x1]
    %v431 = vld [vmem:[%s10] sm:$0x1]
    %v432 = vsel %vm135, %v428, 0.0
    %433 = vadd.xlane.f32.xlu0 %v432
    %v434 = vpop.xlane.xlu0 %433
    %v435 = vsel %vm135, %v429, 0.0
    %436 = vadd.xlane.f32.xlu0 %v435
    %v437 = vpop.xlane.xlu0 %436
    %v438 = vmul.f32 %v434, %v148
    %v439 = vmul.f32 %v437, %v148
    %v440 = vsub.f32 %v428, %v438
    %v441 = vsub.f32 %v429, %v439
    %v442 = vmul.f32 %v440, %v440
    %v443 = vmul.f32 %v441, %v441
    %v444 = vsel %vm135, %v442, 0.0
    %445 = vadd.xlane.f32.xlu0 %v444
    %v446 = vpop.xlane.xlu0 %445
    %v447 = vsel %vm135, %v443, 0.0
    %448 = vadd.xlane.f32.xlu0 %v447
    %v449 = vpop.xlane.xlu0 %448
    %v450 = vmul.f32 %v446, %v148
    %v451 = vmul.f32 %v449, %v148
    %v452 = vadd.f32 %v450, 1e-05
    %v453 = vadd.f32 %v451, 1e-05
    %v454 = vrsqrt.pop %v452
    %v455 = vmul.f32 %v454, %v452
    %v456 = vmul.f32 %v455, %v454
    %v457 = vmul.f32 0.5, %v456
    %v458 = vsub.f32 1.5, %v457
    %v459 = vmul.f32 %v454, %v458
    %vm460 = vweird.f32 %v452
    %vm461 = vweird.f32 %v454
    %vm462 = vmor %vm460, %vm461
    %v463 = vsel %vm462, %v454, %v459
    %v464 = vrsqrt.pop %v453
    %v465 = vmul.f32 %v464, %v453
    %v466 = vmul.f32 %v465, %v464
    %v467 = vmul.f32 0.5, %v466
    %v468 = vsub.f32 1.5, %v467
    %v469 = vmul.f32 %v464, %v468
    %vm470 = vweird.f32 %v453
    %vm471 = vweird.f32 %v464
    %vm472 = vmor %vm470, %vm471
    %v473 = vsel %vm472, %v464, %v469
    %v474 = vmul.f32 %v440, %v463
    %v475 = vmul.f32 %v441, %v473
    %v477 = vperm.slane %v430, 0
    %v479 = vmul.f32 %v474, %v477
    %v480 = vmul.f32 %v475, %v477
    %v482 = vperm.slane %v431, 0
    %v484 = vadd.f32 %v479, %v482
    %v485 = vadd.f32 %v480, %v482
    %v486 = vpack.c.bf16 %v485, %v484
    %v487 = vld [vmem:[%s11] sm:$0xf]
    %v488 = vld [vmem:[%s11 + $0x4] sm:$0xf]
    %v489 = vld [vmem:[%s11 + $0x8] sm:$0xf]
    %v490 = vld [vmem:[%s11 + $0xc] sm:$0xf]
    %v491 = vld [vmem:[%s12] sm:$0x1]
    %v493 = vperm.slane %v491, 0
    %v499 = vunpack.c.l.b16 %v487
    %v500 = vunpack.c.l.b16 %v488
    %v501 = vunpack.c.l.b16 %v489
    %v502 = vunpack.c.l.b16 %v490
    %v503 = vpack.c.b16 %v500, %v499
    %v504 = vpack.c.b16 %v502, %v501
    %v508 = vsel %vm135, %v486, 0
    %510 = vmatpush.bf16.msra.mxu0 0
    %511 = vmatpush.bf16.msra.mxu0 0
    %512 = vmatpush.bf16.msra.mxu0 0
    %513 = vmatpush.bf16.msra.mxu0 0
    %514 = vmatpush.bf16.msra.mxu0 0
    %515 = vmatpush.bf16.msra.mxu0 0
    %516 = vmatpush.bf16.msra.mxu0 %v504
    %517 = vmatpush.bf16.msra.mxu0 %v503
    %518 = vmatmul.bf16.gmra.mxu0 %v508
    %v519 = vpop.f32.mrf.mxu0
    %v520 = vadd.f32 %v493, %v519
    %v521 = vpop.f32.mrf.mxu0
    %v522 = vadd.f32 %v493, %v521
    %523 = vdwg.mxu0
    %v524 = vmul.f32 %v520, %v520
    %v525 = vmul.f32 %v522, %v522
    %v526 = vmul.f32 %v520, %v524
    %v527 = vmul.f32 %v522, %v525
    %v528 = vmul.f32 %v526, 0.044715
    %v529 = vmul.f32 %v527, 0.044715
    %v530 = vadd.f32 %v520, %v528
    %v531 = vadd.f32 %v522, %v529
    %v532 = vmul.f32 %v530, 0.7978846
    %v533 = vmul.f32 %v531, 0.7978846
    %v534 = vtanh.pop %v532
    %v535 = vtanh.pop %v533
    %v536 = vadd.f32 %v534, 1.0
    %v537 = vadd.f32 %v535, 1.0
    %v538 = vmul.f32 %v536, 0.5
    %v539 = vmul.f32 %v537, 0.5
    %v540 = vmul.f32 %v520, %v538
    %v541 = vmul.f32 %v522, %v539
    %v542 = vpack.c.bf16 %v541, %v540
    %v543 = vld [vmem:[%s13] sm:$0xf]
    %v544 = vld [vmem:[%s13 + $0x4] sm:$0xf]
    %v545 = vld [vmem:[%s13 + $0x8] sm:$0xf]
    %v546 = vld [vmem:[%s13 + $0xc] sm:$0xf]
    %v547 = vld [vmem:[%s13 + $0x10] sm:$0xf]
    %v548 = vld [vmem:[%s13 + $0x14] sm:$0xf]
    %v549 = vld [vmem:[%s13 + $0x18] sm:$0xf]
    %v550 = vld [vmem:[%s13 + $0x1c] sm:$0xf]
    %v551 = vld [vmem:[%s13 + $0x20] sm:$0xf]
    %v552 = vld [vmem:[%s13 + $0x24] sm:$0xf]
    %v553 = vld [vmem:[%s13 + $0x28] sm:$0xf]
    %v554 = vld [vmem:[%s13 + $0x2c] sm:$0xf]
    %v555 = vld [vmem:[%s13 + $0x30] sm:$0xf]
    %v556 = vld [vmem:[%s13 + $0x34] sm:$0xf]
    %v557 = vld [vmem:[%s13 + $0x38] sm:$0xf]
    %v558 = vld [vmem:[%s13 + $0x3c] sm:$0xf]
    %v559 = vld [vmem:[%s14] sm:$0x1]
    %v561 = vperm.slane %v559, 0
    %v579 = vunpack.c.l.b16 %v543
    %v580 = vunpack.c.l.b16 %v544
    %v581 = vunpack.c.l.b16 %v545
    %v582 = vunpack.c.l.b16 %v546
    %v583 = vunpack.c.l.b16 %v547
    %v584 = vunpack.c.l.b16 %v548
    %v585 = vunpack.c.l.b16 %v549
    %v586 = vunpack.c.l.b16 %v550
    %v587 = vunpack.c.l.b16 %v551
    %v588 = vunpack.c.l.b16 %v552
    %v589 = vunpack.c.l.b16 %v553
    %v590 = vunpack.c.l.b16 %v554
    %v591 = vunpack.c.l.b16 %v555
    %v592 = vunpack.c.l.b16 %v556
    %v593 = vunpack.c.l.b16 %v557
    %v594 = vunpack.c.l.b16 %v558
    %v595 = vpack.c.b16 %v580, %v579
    %v596 = vpack.c.b16 %v582, %v581
    %v597 = vpack.c.b16 %v584, %v583
    %v598 = vpack.c.b16 %v586, %v585
    %v599 = vpack.c.b16 %v588, %v587
    %v600 = vpack.c.b16 %v590, %v589
    %v601 = vpack.c.b16 %v592, %v591
    %v602 = vpack.c.b16 %v594, %v593
    %611 = vmatpush.bf16.msra.mxu0 %v602
    %612 = vmatpush.bf16.msra.mxu0 %v601
    %613 = vmatpush.bf16.msra.mxu0 %v600
    %614 = vmatpush.bf16.msra.mxu0 %v599
    %615 = vmatpush.bf16.msra.mxu0 %v598
    %616 = vmatpush.bf16.msra.mxu0 %v597
    %617 = vmatpush.bf16.msra.mxu0 %v596
    %618 = vmatpush.bf16.msra.mxu0 %v595
    %619 = vmatmul.bf16.gmra.mxu0 %v542
    %v620 = vpop.f32.mrf.mxu0
    %v621 = vadd.f32 %v561, %v620
    %v622 = vpop.f32.mrf.mxu0
    %v623 = vadd.f32 %v561, %v622
    %624 = vdwg.mxu0
    %v625 = vadd.f32 %v428, %v621
    %v626 = vadd.f32 %v429, %v623
    %s627 = scalar_lea.vmem %s3, 1
    %v628 = vld [vmem:[%s627] sm:$0x1]
    %s629 = scalar_lea.vmem %s4, 1
    %v630 = vld [vmem:[%s629] sm:$0x1]
    %v631 = vsel %vm135, %v625, 0.0
    %632 = vadd.xlane.f32.xlu0 %v631
    %v633 = vpop.xlane.xlu0 %632
    %v634 = vsel %vm135, %v626, 0.0
    %635 = vadd.xlane.f32.xlu0 %v634
    %v636 = vpop.xlane.xlu0 %635
    %v637 = vmul.f32 %v633, %v148
    %v638 = vmul.f32 %v636, %v148
    %v639 = vsub.f32 %v625, %v637
    %v640 = vsub.f32 %v626, %v638
    %v641 = vmul.f32 %v639, %v639
    %v642 = vmul.f32 %v640, %v640
    %v643 = vsel %vm135, %v641, 0.0
    %644 = vadd.xlane.f32.xlu0 %v643
    %v645 = vpop.xlane.xlu0 %644
    %v646 = vsel %vm135, %v642, 0.0
    %647 = vadd.xlane.f32.xlu0 %v646
    %v648 = vpop.xlane.xlu0 %647
    %v649 = vmul.f32 %v645, %v148
    %v650 = vmul.f32 %v648, %v148
    %v651 = vadd.f32 %v649, 1e-05
    %v652 = vadd.f32 %v650, 1e-05
    %v653 = vrsqrt.pop %v651
    %v654 = vmul.f32 %v653, %v651
    %v655 = vmul.f32 %v654, %v653
    %v656 = vmul.f32 0.5, %v655
    %v657 = vsub.f32 1.5, %v656
    %v658 = vmul.f32 %v653, %v657
    %vm659 = vweird.f32 %v651
    %vm660 = vweird.f32 %v653
    %vm661 = vmor %vm659, %vm660
    %v662 = vsel %vm661, %v653, %v658
    %v663 = vrsqrt.pop %v652
    %v664 = vmul.f32 %v663, %v652
    %v665 = vmul.f32 %v664, %v663
    %v666 = vmul.f32 0.5, %v665
    %v667 = vsub.f32 1.5, %v666
    %v668 = vmul.f32 %v663, %v667
    %vm669 = vweird.f32 %v652
    %vm670 = vweird.f32 %v663
    %vm671 = vmor %vm669, %vm670
    %v672 = vsel %vm671, %v663, %v668
    %v673 = vmul.f32 %v639, %v662
    %v674 = vmul.f32 %v640, %v672
    %v676 = vperm.slane %v628, 0
    %v678 = vmul.f32 %v673, %v676
    %v679 = vmul.f32 %v674, %v676
    %v681 = vperm.slane %v630, 0
    %v683 = vadd.f32 %v678, %v681
    %v684 = vadd.f32 %v679, %v681
    %v685 = vpack.c.bf16 %v684, %v683
    %s686 = scalar_lea.vmem %s5, 16
    %v687 = vld [vmem:[%s686] sm:$0xf]
    %v688 = vld [vmem:[%s686 + $0x4] sm:$0xf]
    %v689 = vld [vmem:[%s686 + $0x8] sm:$0xf]
    %v690 = vld [vmem:[%s686 + $0xc] sm:$0xf]
    %s691 = scalar_lea.vmem %s6, 1
    %v692 = vld [vmem:[%s691] sm:$0x1]
    %v694 = vperm.slane %v692, 0
    %v700 = vunpack.c.l.b16 %v687
    %v701 = vunpack.c.l.b16 %v688
    %v702 = vunpack.c.l.b16 %v689
    %v703 = vunpack.c.l.b16 %v690
    %v704 = vpack.c.b16 %v701, %v700
    %v705 = vpack.c.b16 %v703, %v702
    %v709 = vsel %vm135, %v685, 0
    %711 = vmatpush.bf16.msra.mxu0 0
    %712 = vmatpush.bf16.msra.mxu0 0
    %713 = vmatpush.bf16.msra.mxu0 0
    %714 = vmatpush.bf16.msra.mxu0 0
    %715 = vmatpush.bf16.msra.mxu0 0
    %716 = vmatpush.bf16.msra.mxu0 0
    %717 = vmatpush.bf16.msra.mxu0 %v705
    %718 = vmatpush.bf16.msra.mxu0 %v704
    %719 = vmatmul.bf16.gmra.mxu0 %v709
    %v720 = vpop.f32.mrf.mxu0
    %v721 = vadd.f32 %v694, %v720
    %v722 = vpop.f32.mrf.mxu0
    %v723 = vadd.f32 %v694, %v722
    %724 = vdwg.mxu0
    %s725 = scalar_lea.vmem %s7, 16
    %v726 = vld [vmem:[%s725] sm:$0xf]
    %v727 = vld [vmem:[%s725 + $0x4] sm:$0xf]
    %v728 = vld [vmem:[%s725 + $0x8] sm:$0xf]
    %v729 = vld [vmem:[%s725 + $0xc] sm:$0xf]
    %v730 = vpack.c.bf16 %v723, %v721
    %732 = vrot.lane.b32.xlu0 %v730, 96
    %v733 = vpop.permute.xlu0 %732
    %v735 = vsel %vm243, %v730, 0
    %v738 = vsel %vm243, %v733, 0
    %740 = vmatpush.bf16.xpose.msra.mxu0 0
    %741 = vmatpush.bf16.xpose.msra.mxu0 0
    %742 = vmatpush.bf16.xpose.msra.mxu0 0
    %743 = vmatpush.bf16.xpose.msra.mxu0 0
    %744 = vmatpush.bf16.xpose.msra.mxu0 0
    %745 = vmatpush.bf16.xpose.msra.mxu0 0
    %746 = vmatpush.bf16.xpose.msra.mxu0 0
    %747 = vmatpush.bf16.xpose.msra.mxu0 %v738
    %748 = vmatmul.bf16.gmra.mxu0 %v735
    %v749 = vpop.f32.mrf.mxu0
    %v750 = vadd.f32 %v131, %v749
    %v751 = vpop.f32.mrf.mxu0
    %v752 = vadd.f32 %v132, %v751
    %753 = vdwg.mxu0
    %v754 = vsel %vm243, %v750, -inf
    %755 = vmax.xlane.f32.xlu0 %v754
    %v756 = vpop.xlane.xlu0 %755
    %v757 = vsel %vm243, %v752, -inf
    %758 = vmax.xlane.f32.xlu0 %v757
    %v759 = vpop.xlane.xlu0 %758
    %v760 = vsub.f32 %v750, %v756
    %v761 = vsub.f32 %v752, %v759
    %v762 = vmul.f32 %v760, 1.442695
    %v763 = vpow.pop %v762
    %v764 = vmul.f32 %v761, 1.442695
    %v765 = vpow.pop %v764
    %v766 = vsel %vm243, %v763, 0.0
    %767 = vadd.xlane.f32.xlu0 %v766
    %v768 = vpop.xlane.xlu0 %767
    %v769 = vsel %vm243, %v765, 0.0
    %770 = vadd.xlane.f32.xlu0 %v769
    %v771 = vpop.xlane.xlu0 %770
    %v772 = vrcp.pop %v768
    %v773 = vrcp.pop %v771
    %v774 = vmul.f32 %v763, %v772
    %v775 = vmul.f32 %v765, %v773
    %v776 = vpack.c.bf16 %v775, %v774
    %777 = vrot.lane.b32.xlu0 %v730, 64
    %v778 = vpop.permute.xlu0 %777
    %v781 = vsel %vm243, %v776, 0
    %783 = vmatpush.bf16.msra.mxu0 0
    %784 = vmatpush.bf16.msra.mxu0 0
    %785 = vmatpush.bf16.msra.mxu0 0
    %786 = vmatpush.bf16.msra.mxu0 0
    %787 = vmatpush.bf16.msra.mxu0 0
    %788 = vmatpush.bf16.msra.mxu0 0
    %789 = vmatpush.bf16.msra.mxu0 0
    %790 = vmatpush.bf16.msra.mxu0 %v778
    %791 = vmatmul.bf16.gmra.mxu0 %v781
    %v792 = vpop.f32.mrf.mxu0
    %v793 = vadd.f32 0.0, %v792
    %v794 = vpop.f32.mrf.mxu0
    %v795 = vadd.f32 0.0, %v794
    %796 = vdwg.mxu0
    %v797 = vpack.c.bf16 %v795, %v793
    %798 = vrot.lane.b32.xlu0 %v730, 112
    %v799 = vpop.permute.xlu0 %798
    %800 = vrot.lane.b32.xlu0 %v730, 80
    %v801 = vpop.permute.xlu0 %800
    %v803 = vsel %vm243, %v799, 0
    %v806 = vsel %vm243, %v801, 0
    %808 = vmatpush.bf16.xpose.msra.mxu0 0
    %809 = vmatpush.bf16.xpose.msra.mxu0 0
    %810 = vmatpush.bf16.xpose.msra.mxu0 0
    %811 = vmatpush.bf16.xpose.msra.mxu0 0
    %812 = vmatpush.bf16.xpose.msra.mxu0 0
    %813 = vmatpush.bf16.xpose.msra.mxu0 0
    %814 = vmatpush.bf16.xpose.msra.mxu0 0
    %815 = vmatpush.bf16.xpose.msra.mxu0 %v806
    %816 = vmatmul.bf16.gmra.mxu0 %v803
    %v817 = vpop.f32.mrf.mxu0
    %v818 = vadd.f32 %v131, %v817
    %v819 = vpop.f32.mrf.mxu0
    %v820 = vadd.f32 %v132, %v819
    %821 = vdwg.mxu0
    %v822 = vsel %vm243, %v818, -inf
    %823 = vmax.xlane.f32.xlu0 %v822
    %v824 = vpop.xlane.xlu0 %823
    %v825 = vsel %vm243, %v820, -inf
    %826 = vmax.xlane.f32.xlu0 %v825
    %v827 = vpop.xlane.xlu0 %826
    %v828 = vsub.f32 %v818, %v824
    %v829 = vsub.f32 %v820, %v827
    %v830 = vmul.f32 %v828, 1.442695
    %v831 = vpow.pop %v830
    %v832 = vmul.f32 %v829, 1.442695
    %v833 = vpow.pop %v832
    %v834 = vsel %vm243, %v831, 0.0
    %835 = vadd.xlane.f32.xlu0 %v834
    %v836 = vpop.xlane.xlu0 %835
    %v837 = vsel %vm243, %v833, 0.0
    %838 = vadd.xlane.f32.xlu0 %v837
    %v839 = vpop.xlane.xlu0 %838
    %v840 = vrcp.pop %v836
    %v841 = vrcp.pop %v839
    %v842 = vmul.f32 %v831, %v840
    %v843 = vmul.f32 %v833, %v841
    %v844 = vpack.c.bf16 %v843, %v842
    %845 = vrot.lane.b32.xlu0 %v730, 48
    %v846 = vpop.permute.xlu0 %845
    %v849 = vsel %vm243, %v844, 0
    %851 = vmatpush.bf16.msra.mxu0 0
    %852 = vmatpush.bf16.msra.mxu0 0
    %853 = vmatpush.bf16.msra.mxu0 0
    %854 = vmatpush.bf16.msra.mxu0 0
    %855 = vmatpush.bf16.msra.mxu0 0
    %856 = vmatpush.bf16.msra.mxu0 0
    %857 = vmatpush.bf16.msra.mxu0 0
    %858 = vmatpush.bf16.msra.mxu0 %v846
    %859 = vmatmul.bf16.gmra.mxu0 %v849
    %v860 = vpop.f32.mrf.mxu0
    %v861 = vadd.f32 0.0, %v860
    %v862 = vpop.f32.mrf.mxu0
    %v863 = vadd.f32 0.0, %v862
    %864 = vdwg.mxu0
    %v865 = vpack.c.bf16 %v863, %v861
    %v868 = vunpack.c.l.b16 %v728
    %v869 = vunpack.c.l.b16 %v729
    %v870 = vpack.c.b16 %v869, %v868
    %v873 = vsel %vm243, %v865, 0
    %875 = vmatpush.bf16.msra.mxu0 0
    %876 = vmatpush.bf16.msra.mxu0 0
    %877 = vmatpush.bf16.msra.mxu0 0
    %878 = vmatpush.bf16.msra.mxu0 0
    %879 = vmatpush.bf16.msra.mxu0 0
    %880 = vmatpush.bf16.msra.mxu0 0
    %881 = vmatpush.bf16.msra.mxu0 0
    %882 = vmatpush.bf16.msra.mxu0 %v870
    %883 = vmatmul.bf16.gmra.mxu0 %v873
    %v884 = vpop.f32.mrf.mxu0
    %v885 = vadd.f32 0.0, %v884
    %v886 = vpop.f32.mrf.mxu0
    %v887 = vadd.f32 0.0, %v886
    %888 = vdwg.mxu0
    %v891 = vunpack.c.l.b16 %v726
    %v892 = vunpack.c.l.b16 %v727
    %v893 = vpack.c.b16 %v892, %v891
    %v896 = vsel %vm243, %v797, 0
    %898 = vmatpush.bf16.msra.mxu0 0
    %899 = vmatpush.bf16.msra.mxu0 0
    %900 = vmatpush.bf16.msra.mxu0 0
    %901 = vmatpush.bf16.msra.mxu0 0
    %902 = vmatpush.bf16.msra.mxu0 0
    %903 = vmatpush.bf16.msra.mxu0 0
    %904 = vmatpush.bf16.msra.mxu0 0
    %905 = vmatpush.bf16.msra.mxu0 %v893
    %906 = vmatmul.bf16.gmra.mxu0 %v896
    %v907 = vpop.f32.mrf.mxu0
    %v908 = vadd.f32 %v885, %v907
    %v909 = vpop.f32.mrf.mxu0
    %v910 = vadd.f32 %v887, %v909
    %911 = vdwg.mxu0
    %v912 = vadd.f32 %v625, %v908
    %v913 = vadd.f32 %v626, %v910
    %s914 = scalar_lea.vmem %s8, 1
    %v915 = vld [vmem:[%s914] sm:$0x1]
    %v917 = vperm.slane %v915, 0
    %v919 = vadd.f32 %v912, %v917
    %v920 = vadd.f32 %v913, %v917
    %s921 = scalar_lea.vmem %s9, 1
    %v922 = vld [vmem:[%s921] sm:$0x1]
    %s923 = scalar_lea.vmem %s10, 1
    %v924 = vld [vmem:[%s923] sm:$0x1]
    %v925 = vsel %vm135, %v919, 0.0
    %926 = vadd.xlane.f32.xlu0 %v925
    %v927 = vpop.xlane.xlu0 %926
    %v928 = vsel %vm135, %v920, 0.0
    %929 = vadd.xlane.f32.xlu0 %v928
    %v930 = vpop.xlane.xlu0 %929
    %v931 = vmul.f32 %v927, %v148
    %v932 = vmul.f32 %v930, %v148
    %v933 = vsub.f32 %v919, %v931
    %v934 = vsub.f32 %v920, %v932
    %v935 = vmul.f32 %v933, %v933
    %v936 = vmul.f32 %v934, %v934
    %v937 = vsel %vm135, %v935, 0.0
    %938 = vadd.xlane.f32.xlu0 %v937
    %v939 = vpop.xlane.xlu0 %938
    %v940 = vsel %vm135, %v936, 0.0
    %941 = vadd.xlane.f32.xlu0 %v940
    %v942 = vpop.xlane.xlu0 %941
    %v943 = vmul.f32 %v939, %v148
    %v944 = vmul.f32 %v942, %v148
    %v945 = vadd.f32 %v943, 1e-05
    %v946 = vadd.f32 %v944, 1e-05
    %v947 = vrsqrt.pop %v945
    %v948 = vmul.f32 %v947, %v945
    %v949 = vmul.f32 %v948, %v947
    %v950 = vmul.f32 0.5, %v949
    %v951 = vsub.f32 1.5, %v950
    %v952 = vmul.f32 %v947, %v951
    %vm953 = vweird.f32 %v945
    %vm954 = vweird.f32 %v947
    %vm955 = vmor %vm953, %vm954
    %v956 = vsel %vm955, %v947, %v952
    %v957 = vrsqrt.pop %v946
    %v958 = vmul.f32 %v957, %v946
    %v959 = vmul.f32 %v958, %v957
    %v960 = vmul.f32 0.5, %v959
    %v961 = vsub.f32 1.5, %v960
    %v962 = vmul.f32 %v957, %v961
    %vm963 = vweird.f32 %v946
    %vm964 = vweird.f32 %v957
    %vm965 = vmor %vm963, %vm964
    %v966 = vsel %vm965, %v957, %v962
    %v967 = vmul.f32 %v933, %v956
    %v968 = vmul.f32 %v934, %v966
    %v970 = vperm.slane %v922, 0
    %v972 = vmul.f32 %v967, %v970
    %v973 = vmul.f32 %v968, %v970
    %v975 = vperm.slane %v924, 0
    %v977 = vadd.f32 %v972, %v975
    %v978 = vadd.f32 %v973, %v975
    %v979 = vpack.c.bf16 %v978, %v977
    %s980 = scalar_lea.vmem %s11, 16
    %v981 = vld [vmem:[%s980] sm:$0xf]
    %v982 = vld [vmem:[%s980 + $0x4] sm:$0xf]
    %v983 = vld [vmem:[%s980 + $0x8] sm:$0xf]
    %v984 = vld [vmem:[%s980 + $0xc] sm:$0xf]
    %s985 = scalar_lea.vmem %s12, 1
    %v986 = vld [vmem:[%s985] sm:$0x1]
    %v988 = vperm.slane %v986, 0
    %v994 = vunpack.c.l.b16 %v981
    %v995 = vunpack.c.l.b16 %v982
    %v996 = vunpack.c.l.b16 %v983
    %v997 = vunpack.c.l.b16 %v984
    %v998 = vpack.c.b16 %v995, %v994
    %v999 = vpack.c.b16 %v997, %v996
    %v1003 = vsel %vm135, %v979, 0
    %1005 = vmatpush.bf16.msra.mxu0 0
    %1006 = vmatpush.bf16.msra.mxu0 0
    %1007 = vmatpush.bf16.msra.mxu0 0
    %1008 = vmatpush.bf16.msra.mxu0 0
    %1009 = vmatpush.bf16.msra.mxu0 0
    %1010 = vmatpush.bf16.msra.mxu0 0
    %1011 = vmatpush.bf16.msra.mxu0 %v999
    %1012 = vmatpush.bf16.msra.mxu0 %v998
    %1013 = vmatmul.bf16.gmra.mxu0 %v1003
    %v1014 = vpop.f32.mrf.mxu0
    %v1015 = vadd.f32 %v988, %v1014
    %v1016 = vpop.f32.mrf.mxu0
    %v1017 = vadd.f32 %v988, %v1016
    %1018 = vdwg.mxu0
    %v1019 = vmul.f32 %v1015, %v1015
    %v1020 = vmul.f32 %v1017, %v1017
    %v1021 = vmul.f32 %v1015, %v1019
    %v1022 = vmul.f32 %v1017, %v1020
    %v1023 = vmul.f32 %v1021, 0.044715
    %v1024 = vmul.f32 %v1022, 0.044715
    %v1025 = vadd.f32 %v1015, %v1023
    %v1026 = vadd.f32 %v1017, %v1024
    %v1027 = vmul.f32 %v1025, 0.7978846
    %v1028 = vmul.f32 %v1026, 0.7978846
    %v1029 = vtanh.pop %v1027
    %v1030 = vtanh.pop %v1028
    %v1031 = vadd.f32 %v1029, 1.0
    %v1032 = vadd.f32 %v1030, 1.0
    %v1033 = vmul.f32 %v1031, 0.5
    %v1034 = vmul.f32 %v1032, 0.5
    %v1035 = vmul.f32 %v1015, %v1033
    %v1036 = vmul.f32 %v1017, %v1034
    %v1037 = vpack.c.bf16 %v1036, %v1035
    %s1038 = scalar_lea.vmem %s13, 64
    %v1039 = vld [vmem:[%s1038] sm:$0xf]
    %v1040 = vld [vmem:[%s1038 + $0x4] sm:$0xf]
    %v1041 = vld [vmem:[%s1038 + $0x8] sm:$0xf]
    %v1042 = vld [vmem:[%s1038 + $0xc] sm:$0xf]
    %v1043 = vld [vmem:[%s1038 + $0x10] sm:$0xf]
    %v1044 = vld [vmem:[%s1038 + $0x14] sm:$0xf]
    %v1045 = vld [vmem:[%s1038 + $0x18] sm:$0xf]
    %v1046 = vld [vmem:[%s1038 + $0x1c] sm:$0xf]
    %v1047 = vld [vmem:[%s1038 + $0x20] sm:$0xf]
    %v1048 = vld [vmem:[%s1038 + $0x24] sm:$0xf]
    %v1049 = vld [vmem:[%s1038 + $0x28] sm:$0xf]
    %v1050 = vld [vmem:[%s1038 + $0x2c] sm:$0xf]
    %v1051 = vld [vmem:[%s1038 + $0x30] sm:$0xf]
    %v1052 = vld [vmem:[%s1038 + $0x34] sm:$0xf]
    %v1053 = vld [vmem:[%s1038 + $0x38] sm:$0xf]
    %v1054 = vld [vmem:[%s1038 + $0x3c] sm:$0xf]
    %s1055 = scalar_lea.vmem %s14, 1
    %v1056 = vld [vmem:[%s1055] sm:$0x1]
    %v1058 = vperm.slane %v1056, 0
    %v1076 = vunpack.c.l.b16 %v1039
    %v1077 = vunpack.c.l.b16 %v1040
    %v1078 = vunpack.c.l.b16 %v1041
    %v1079 = vunpack.c.l.b16 %v1042
    %v1080 = vunpack.c.l.b16 %v1043
    %v1081 = vunpack.c.l.b16 %v1044
    %v1082 = vunpack.c.l.b16 %v1045
    %v1083 = vunpack.c.l.b16 %v1046
    %v1084 = vunpack.c.l.b16 %v1047
    %v1085 = vunpack.c.l.b16 %v1048
    %v1086 = vunpack.c.l.b16 %v1049
    %v1087 = vunpack.c.l.b16 %v1050
    %v1088 = vunpack.c.l.b16 %v1051
    %v1089 = vunpack.c.l.b16 %v1052
    %v1090 = vunpack.c.l.b16 %v1053
    %v1091 = vunpack.c.l.b16 %v1054
    %v1092 = vpack.c.b16 %v1077, %v1076
    %v1093 = vpack.c.b16 %v1079, %v1078
    %v1094 = vpack.c.b16 %v1081, %v1080
    %v1095 = vpack.c.b16 %v1083, %v1082
    %v1096 = vpack.c.b16 %v1085, %v1084
    %v1097 = vpack.c.b16 %v1087, %v1086
    %v1098 = vpack.c.b16 %v1089, %v1088
    %v1099 = vpack.c.b16 %v1091, %v1090
    %1108 = vmatpush.bf16.msra.mxu0 %v1099
    %1109 = vmatpush.bf16.msra.mxu0 %v1098
    %1110 = vmatpush.bf16.msra.mxu0 %v1097
    %1111 = vmatpush.bf16.msra.mxu0 %v1096
    %1112 = vmatpush.bf16.msra.mxu0 %v1095
    %1113 = vmatpush.bf16.msra.mxu0 %v1094
    %1114 = vmatpush.bf16.msra.mxu0 %v1093
    %1115 = vmatpush.bf16.msra.mxu0 %v1092
    %1116 = vmatmul.bf16.gmra.mxu0 %v1037
    %v1117 = vpop.f32.mrf.mxu0
    %v1118 = vadd.f32 %v1058, %v1117
    %v1119 = vpop.f32.mrf.mxu0
    %v1120 = vadd.f32 %v1058, %v1119
    %1121 = vdwg.mxu0
    %v1122 = vadd.f32 %v919, %v1118
    %v1123 = vadd.f32 %v920, %v1120
    %v1124 = vpack.c.bf16 %v1123, %v1122
    %v1125 = vld [vmem:[%s15] sm:$0xf]
    %v1126 = vld [vmem:[%s15 + $0x4] sm:$0xf]
    %v1127 = vld [vmem:[%s15 + $0x8] sm:$0xf]
    %v1128 = vld [vmem:[%s15 + $0xc] sm:$0xf]
    %v1129 = vld [vmem:[%s16] sm:$0x1]
    %v1131 = vperm.slane %v1129, 0
    %v1137 = vunpack.c.l.b16 %v1125
    %v1138 = vunpack.c.l.b16 %v1126
    %v1139 = vunpack.c.l.b16 %v1127
    %v1140 = vunpack.c.l.b16 %v1128
    %v1141 = vpack.c.b16 %v1138, %v1137
    %v1142 = vpack.c.b16 %v1140, %v1139
    %v1146 = vsel %vm135, %v1124, 0
    %1148 = vmatpush.bf16.msra.mxu0 0
    %1149 = vmatpush.bf16.msra.mxu0 0
    %1150 = vmatpush.bf16.msra.mxu0 0
    %1151 = vmatpush.bf16.msra.mxu0 0
    %1152 = vmatpush.bf16.msra.mxu0 0
    %1153 = vmatpush.bf16.msra.mxu0 0
    %1154 = vmatpush.bf16.msra.mxu0 %v1142
    %1155 = vmatpush.bf16.msra.mxu0 %v1141
    %1156 = vmatmul.bf16.gmra.mxu0 %v1146
    %v1157 = vpop.f32.mrf.mxu0
    %v1158 = vadd.f32 %v1131, %v1157
    %v1159 = vpop.f32.mrf.mxu0
    %v1160 = vadd.f32 %v1131, %v1159
    %1161 = vdwg.mxu0
    %1162 = vst [vmem:[#allocation5] sm:$0xff] %v1158
    %1163 = vst [vmem:[#allocation5 + $0x8] sm:$0xff] %v1160
    // Predicated region
    $region66: #{tpu_custom_call.1} parent=1 // pred_check
      _
    $region67: #{tpu_custom_call.1} parent=1 // pred_check_branch
      %1165 = sbr.rel (0) target = $region69
    $region68: #{tpu_custom_call.1} parent=1 // pred_region
      %1167 = vsyncadd [#allocation6], 0
      %s1168 = sshll.u32 [#allocation5], 4
      %s1169 = int_to_ptr.vmem [resolvable:$true] %s1168
      %s1170 = sshll.u32 %s17, 4
      %s1171 = int_to_ptr.hbm [resolvable:$true] %s1170
      %1176 = dma.vmem_to_hbm [thread:$0]  %s1169, 256, %s1171, [#allocation6], 128, 128, 8
    $region69: #{tpu_custom_call.1} parent=1 // pred_fallthru
      _
    // Predicated region
    $region70: #{tpu_custom_call.1} parent=1 // pred_check
      _
    $region71: #{tpu_custom_call.1} parent=1 // pred_check_branch
      %1178 = sbr.rel (0) target = $region73
    $region72: #{tpu_custom_call.1} parent=1 // pred_region
      %1180 = dma.done [#allocation6], 256
    $region73: #{tpu_custom_call.1} parent=1 // pred_fallthru
      _
    %1181 = vsyncpa [#allocation6], 1

</llo_original>
